<compile_context>
chip_gen: v6e
topology: v6e:2x2x1
jax: 0.10.0
libtpu: 0.0.40
codegen_flags: <defaults>
</compile_context>

<pallas_src>
import functools

import jax
import jax.numpy as jnp
from jax.experimental import pallas as pl
from jax.experimental.pallas import tpu as pltpu

LANES = 128


def mlp_kernel(x_ref, w1_ref, b1_ref, w2_ref, b2_ref, o_ref):
    # Layer 0: Linear(784 -> 256). Cast x to bf16 in-kernel (VPU) so the host
    # side never materializes a padded/cast copy of the activations; bf16 MXU
    # operands with f32 accumulation.
    x = x_ref[...].astype(jnp.bfloat16)
    h = jnp.dot(x, w1_ref[...], preferred_element_type=jnp.float32)
    # Layer 1: bias + ReLU in f32 on the VPU.
    h = jnp.maximum(h + b1_ref[...], 0.0)
    # Layer 2: Linear(256 -> 10, lane-padded to 128). Kept in f32: it is tiny
    # ([tb,256]x[256,128], nowhere near the bottleneck) and full precision here
    # tightens parity with the f32 reference.
    y = jnp.dot(h, w2_ref[...], preferred_element_type=jnp.float32)
    o_ref[...] = (y + b2_ref[...]).astype(o_ref.dtype)


def prepare_params(w1, b1, w2, b2):
    """One-time weight preparation (hoisted out of the per-call path).

    w1: [784,256] f32 -> bf16             (dominant HBM load, halved)
    b1: [1,256]   f32                      (unchanged)
    w2: [256,10]  f32 -> [256,128] f32     (lane-padded; stays f32 for accuracy)
    b2: [1,10]    f32 -> [1,128]   f32     (lane-padded)
    """
    _, o = w2.shape
    o_pad = max(LANES, pl.cdiv(o, LANES) * LANES)
    w1_bf = w1.astype(jnp.bfloat16)
    w2_p = jnp.pad(w2, ((0, 0), (0, o_pad - o)))
    b2_p = jnp.pad(b2, ((0, 0), (0, o_pad - o)))
    return w1_bf, b1, w2_p, b2_p


def _round_up(n, m):
    return ((n + m - 1) // m) * m


@functools.partial(jax.jit, static_argnames=("out_features", "tb"))
def my_sequential_forward(x, w1_bf, b1, w2_p, b2_p, *, out_features, tb=256):
    """Fused forward pass of MySequential(Linear(784,256), ReLU, Linear(256,10)).

    x:      [B, 784] f32 (unpadded, cast to bf16 inside the kernel)
    w1_bf:  [784, 256] bf16        b1:   [1, 256] f32
    w2_p:   [256, 128] f32         b2_p: [1, 128] f32   (lane-padded)
    Returns [B, out_features] f32.
    """
    B, F = x.shape
    H = w1_bf.shape[1]
    O_pad = w2_p.shape[1]

    # Batch tile: 256 fills the v6e/v7x MXU (a multiple of 128, so also native
    # on v5e); clamp to the (sublane-rounded) batch so small batches run as a
    # single grid step.
    tb_eff = min(tb, _round_up(B, 8))
    num_steps = pl.cdiv(B, tb_eff)

    # Megacore: only shard the batch axis across TensorCores when there are
    # enough grid steps to amortize the duplicated weight DMA into each core's
    # private VMEM (perf review, v7x small-batch caveat).
    dim_sem = ("parallel",) if num_steps >= 4 else ("arbitrary",)

    # Advisory cost estimate: true (unpadded) FLOP dims, each array counted once.
    flops = 2 * B * (F * H + H * out_features)
    bytes_accessed = (
        B * F * 4          # x (f32, streamed)
        + F * H * 2        # w1 (bf16, VMEM-resident)
        + H * 4            # b1
        + H * O_pad * 4    # w2 (f32, lane-padded)
        + O_pad * 4        # b2
        + B * O_pad * 4    # out (lane-dense f32)
    )

    out = pl.pallas_call(
        mlp_kernel,
        out_shape=jax.ShapeDtypeStruct((B, O_pad), jnp.float32),
        grid=(num_steps,),
        in_specs=[
            # x: one batch tile per grid step (double-buffered by Pallas).
            # F == 784 equals the full array dim, so no lane padding / host copy
            # is needed; a partial last batch block is masked on writeback.
            pl.BlockSpec((tb_eff, F), lambda i: (i, 0)),
            # Weights / biases: constant block index -> stay resident in VMEM
            # across grid steps (no re-DMA).
            # TODO(synk): pipeline_mode=pl.Buffered(1) on these would drop the
            # unused second buffer (~0.5 MiB); skipped since VMEM headroom is
            # ample (<2 MiB total vs 32 MiB scoped default).
            pl.BlockSpec((F, H), lambda i: (0, 0)),
            pl.BlockSpec((1, H), lambda i: (0, 0)),
            pl.BlockSpec((H, O_pad), lambda i: (0, 0)),
            pl.BlockSpec((1, O_pad), lambda i: (0, 0)),
        ],
        out_specs=pl.BlockSpec((tb_eff, O_pad), lambda i: (i, 0)),
        compiler_params=pltpu.CompilerParams(
            dimension_semantics=dim_sem,
        ),
        cost_estimate=pl.CostEstimate(
            flops=flops, transcendentals=0, bytes_accessed=bytes_accessed
        ),
    )(x, w1_bf, b1, w2_p, b2_p)

    # Strip output lane padding (fused into this jitted call).
    return out[:, :out_features]


def reference_forward(x, w1, b1, w2, b2):
    h = jnp.maximum(x @ w1 + b1, 0.0)
    return h @ w2 + b2


if __name__ == "__main__":
    B, F_IN, HID, F_OUT = 200, 784, 256, 10

    key = jax.random.PRNGKey(0)
    kx, kw1, kb1, kw2, kb2 = jax.random.split(key, 5)

    # Deterministic parameter init (PyTorch-style uniform(-1/sqrt(fan_in), +)).
    x = jax.random.normal(kx, (B, F_IN), dtype=jnp.float32)
    lim1 = 1.0 / jnp.sqrt(jnp.float32(F_IN))
    w1 = jax.random.uniform(kw1, (F_IN, HID), jnp.float32, -lim1, lim1)
    b1 = jax.random.uniform(kb1, (1, HID), jnp.float32, -lim1, lim1)
    lim2 = 1.0 / jnp.sqrt(jnp.float32(HID))
    w2 = jax.random.uniform(kw2, (HID, F_OUT), jnp.float32, -lim2, lim2)
    b2 = jax.random.uniform(kb2, (1, F_OUT), jnp.float32, -lim2, lim2)

    # One-time weight prep, hoisted out of the per-call (jitted) forward path.
    # TODO(synk): for a repeated-inference loop, a P10-style cross-pallas_call
    # weight prefetch (semaphore + VMEM-ref future) would hide the w1 HBM load
    # entirely; unnecessary for this single-shot script.
    params = jax.block_until_ready(prepare_params(w1, b1, w2, b2))

    out = my_sequential_forward(x, *params, out_features=F_OUT)
    out = jax.block_until_ready(out)

    ref = reference_forward(x, w1, b1, w2, b2)
    assert out.shape == (B, F_OUT)
    # bf16 first-layer MXU operands (f32 accumulation, f32 second layer).
    assert jnp.allclose(out, ref, atol=1e-2, rtol=1e-2), (
        float(jnp.max(jnp.abs(out - ref)))
    )

    print("KERNEL_OK")
</pallas_src>

<mosaic_0001>
module attributes {stable_mosaic.version = 11 : i64} {
  func.func @mlp_kernel(%arg0: i32, %arg1: memref<200x784xf32, #tpu.memory_space<vmem>>, %arg2: memref<784x256xbf16, #tpu.memory_space<vmem>>, %arg3: memref<1x256xf32, #tpu.memory_space<vmem>>, %arg4: memref<256x128xf32, #tpu.memory_space<vmem>>, %arg5: memref<1x128xf32, #tpu.memory_space<vmem>>, %arg6: memref<200x128xf32, #tpu.memory_space<vmem>>) attributes {dimension_semantics = [#tpu.dimension_semantics<arbitrary>], iteration_bounds = array<i64: 1>, scalar_prefetch = 0 : i64, scratch_operands = 0 : i64, tpu.core_type = #tpu.core_type<tc>, window_params = [{transform_indices = @transform_0, window_bounds = array<i64: 200, 784>}, {pipeline_mode = #tpu.pipeline_mode<synchronous>, transform_indices = @transform_1, window_bounds = array<i64: 784, 256>}, {pipeline_mode = #tpu.pipeline_mode<synchronous>, transform_indices = @transform_2, window_bounds = array<i64: 1, 256>}, {pipeline_mode = #tpu.pipeline_mode<synchronous>, transform_indices = @transform_3, window_bounds = array<i64: 256, 128>}, {pipeline_mode = #tpu.pipeline_mode<synchronous>, transform_indices = @transform_4, window_bounds = array<i64: 1, 128>}, {transform_indices = @transform_5, window_bounds = array<i64: 200, 128>}]} {
    %c0 = arith.constant 0 : index
    %c0_0 = arith.constant 0 : index
    %0 = vector.load %arg1[%c0, %c0_0] : memref<200x784xf32, #tpu.memory_space<vmem>>, vector<200x784xf32>
    %1 = arith.truncf %0 : vector<200x784xf32> to vector<200x784xbf16>
    %c0_1 = arith.constant 0 : index
    %c0_2 = arith.constant 0 : index
    %2 = vector.load %arg2[%c0_1, %c0_2] : memref<784x256xbf16, #tpu.memory_space<vmem>>, vector<784x256xbf16>
    %cst = arith.constant dense<0.000000e+00> : vector<200x256xf32>
    %3 = tpu.matmul %1, %2, %cst {dimension_numbers = #tpu.dot_dimension_numbers<[1], [0], [0], [1], [0, 0, 1, 1], [], []>} : vector<200x784xbf16>, vector<784x256xbf16>, vector<200x256xf32> -> vector<200x256xf32>
    %c0_3 = arith.constant 0 : index
    %c0_4 = arith.constant 0 : index
    %4 = vector.load %arg3[%c0_3, %c0_4] : memref<1x256xf32, #tpu.memory_space<vmem>>, vector<1x256xf32>
    %5 = vector.broadcast %4 : vector<1x256xf32> to vector<200x256xf32>
    %6 = arith.addf %3, %5 : vector<200x256xf32>
    %cst_5 = arith.constant 0.000000e+00 : f32
    %7 = vector.broadcast %cst_5 : f32 to vector<200x256xf32>
    %8 = arith.maximumf %6, %7 : vector<200x256xf32>
    %c0_6 = arith.constant 0 : index
    %c0_7 = arith.constant 0 : index
    %9 = vector.load %arg4[%c0_6, %c0_7] : memref<256x128xf32, #tpu.memory_space<vmem>>, vector<256x128xf32>
    %cst_8 = arith.constant dense<0.000000e+00> : vector<200x128xf32>
    %10 = tpu.matmul %8, %9, %cst_8 {dimension_numbers = #tpu.dot_dimension_numbers<[1], [0], [0], [1], [0, 0, 1, 1], [], []>} : vector<200x256xf32>, vector<256x128xf32>, vector<200x128xf32> -> vector<200x128xf32>
    %c0_9 = arith.constant 0 : index
    %c0_10 = arith.constant 0 : index
    %11 = vector.load %arg5[%c0_9, %c0_10] : memref<1x128xf32, #tpu.memory_space<vmem>>, vector<1x128xf32>
    %12 = vector.broadcast %11 : vector<1x128xf32> to vector<200x128xf32>
    %13 = arith.addf %10, %12 : vector<200x128xf32>
    %c0_11 = arith.constant 0 : index
    %c0_12 = arith.constant 0 : index
    %14 = vector.load %arg6[%c0_11, %c0_12] : memref<200x128xf32, #tpu.memory_space<vmem>>, vector<200x128xf32>
    tpu.vector_store %arg6[%c0_11, %c0_12], %13 {strides = array<i32>} : memref<200x128xf32, #tpu.memory_space<vmem>>, vector<200x128xf32>,
    return
  }
  func.func @transform_0(%arg0: i32) -> (i32, i32) {
    %c0_i32 = arith.constant 0 : i32
    %c0_i32_0 = arith.constant 0 : i32
    return %arg0, %c0_i32 : i32, i32
  }
  func.func @transform_1(%arg0: i32) -> (i32, i32) {
    %c0_i32 = arith.constant 0 : i32
    %c0_i32_0 = arith.constant 0 : i32
    %c0_i32_1 = arith.constant 0 : i32
    return %c0_i32, %c0_i32_0 : i32, i32
  }
  func.func @transform_2(%arg0: i32) -> (i32, i32) {
    %c0_i32 = arith.constant 0 : i32
    %c0_i32_0 = arith.constant 0 : i32
    %c0_i32_1 = arith.constant 0 : i32
    return %c0_i32, %c0_i32_0 : i32, i32
  }
  func.func @transform_3(%arg0: i32) -> (i32, i32) {
    %c0_i32 = arith.constant 0 : i32
    %c0_i32_0 = arith.constant 0 : i32
    %c0_i32_1 = arith.constant 0 : i32
    return %c0_i32, %c0_i32_0 : i32, i32
  }
  func.func @transform_4(%arg0: i32) -> (i32, i32) {
    %c0_i32 = arith.constant 0 : i32
    %c0_i32_0 = arith.constant 0 : i32
    %c0_i32_1 = arith.constant 0 : i32
    return %c0_i32, %c0_i32_0 : i32, i32
  }
  func.func @transform_5(%arg0: i32) -> (i32, i32) {
    %c0_i32 = arith.constant 0 : i32
    %c0_i32_0 = arith.constant 0 : i32
    return %arg0, %c0_i32 : i32, i32
  }
}

</mosaic_0001>

<llo_original>
// kernel: my_sequential_forward.1
$region0: #{my_sequential_forward.1}
  #allocation0 [shape = 'u32[]', space=smem, size = 0x4, offset = 0x4, fixed_abs, tag = 'smem constant byte address 0x4 - core index']
  #allocation1 [shape = 'u32[144,128]{1,0:T(1,128)}', space=vmem, size = 0x12000, scoped, tag = 'internal scratch']
  %s0 = inlined_call_operand.hbm [shape: f32[200,784], index: 0, kind: input, shape index: {}]
  %s1 = inlined_call_operand.hbm [shape: bf16[784,256], index: 1, kind: input, shape index: {}]
  %s2 = inlined_call_operand.vmem [shape: f32[1,256], index: 2, kind: input, shape index: {}]
  %s3 = inlined_call_operand.hbm [shape: f32[256,128], index: 3, kind: input, shape index: {}]
  %s4 = inlined_call_operand.vmem [shape: f32[1,128], index: 4, kind: input, shape index: {}]
  %s5 = inlined_call_operand.vmem [shape: f32[200,128], index: 5, kind: output, shape index: {}]
  %s6 = sld [smem:[#allocation0]]
  $region42: #{my_sequential_forward.1} parent=0
    _
  %s8 = ssub.s32 1, %s6
  %s9 = scalar_select 0, %s8, %s6
  $region1: #{my_sequential_forward.1} parent=0
    #allocation2 [shape = 'u8[716800]{0}', space=vmem, size = 0xaf000, scoped, tag = 'input window, operand 0, single buffered']
    #allocation3 [shape = 's32[1]{0}', space=sflag, size = 0x4, scoped, tag = 'scoped memory for my_sequential_forward.1']
    #allocation4 [shape = 'u8[401408]{0}', space=vmem, size = 0x62000, scoped, tag = 'input window, operand 1, single buffered']
    #allocation5 [shape = 's32[1]{0}', space=sflag, size = 0x4, scoped, tag = 'scoped memory for my_sequential_forward.1']
    #allocation6 [shape = 'u8[131072]{0}', space=vmem, size = 0x20000, scoped, tag = 'input window, operand 3, single buffered']
    %10 = vsyncpa [#allocation3], 0
    %11 = vsyncpa [#allocation5], 0
    // Predicated region
    $region2: #{my_sequential_forward.1} parent=1 // pred_check
      _
    $region3: #{my_sequential_forward.1} parent=1 // pred_check_branch
      %13 = sbr.rel (0) target = $region5
    $region4: #{my_sequential_forward.1} parent=1 // pred_region
      %s15 = ssub.s32 22400, 22400
      %16 = vsyncadd [#allocation3], %s15
      %s17 = sshll.u32 [#allocation2], 4
      %s18 = int_to_ptr.vmem [resolvable:$true] %s17
      %23 = dma.hbm_to_vmem [thread:$0]  %s0, 22400, %s18, [#allocation3], 896, 896, 56
    $region5: #{my_sequential_forward.1} parent=1 // pred_fallthru
      _
    // Predicated region
    $region6: #{my_sequential_forward.1} parent=1 // pred_check
      _
    $region7: #{my_sequential_forward.1} parent=1 // pred_check_branch
      %25 = sbr.rel (0) target = $region9
    $region8: #{my_sequential_forward.1} parent=1 // pred_region
      %s27 = ssub.s32 12544, 12544
      %28 = vsyncadd [#allocation5], %s27
      %s29 = sshll.u32 [#allocation4], 4
      %s30 = int_to_ptr.vmem [resolvable:$true] %s29
      %35 = dma.hbm_to_vmem [thread:$0]  %s1, 12544, %s30, [#allocation5], 128, 128, 8
    $region9: #{my_sequential_forward.1} parent=1 // pred_fallthru
      _
    // Predicated region
    $region10: #{my_sequential_forward.1} parent=1 // pred_check
      _
    $region11: #{my_sequential_forward.1} parent=1 // pred_check_branch
      %37 = sbr.rel (0) target = $region13
    $region12: #{my_sequential_forward.1} parent=1 // pred_region
      _
    $region13: #{my_sequential_forward.1} parent=1 // pred_fallthru
      _
    // Predicated region
    $region14: #{my_sequential_forward.1} parent=1 // pred_check
      _
    $region15: #{my_sequential_forward.1} parent=1 // pred_check_branch
      %39 = sbr.rel (0) target = $region17
    $region16: #{my_sequential_forward.1} parent=1 // pred_region
      %s41 = ssub.s32 4096, 4096
      %42 = vsyncadd [#allocation5], %s41
      %s43 = sshll.u32 [#allocation6], 4
      %s44 = int_to_ptr.vmem [resolvable:$true] %s43
      %49 = dma.hbm_to_vmem [thread:$0]  %s3, 4096, %s44, [#allocation5], 128, 128, 8
    $region17: #{my_sequential_forward.1} parent=1 // pred_fallthru
      _
    // Predicated region
    $region18: #{my_sequential_forward.1} parent=1 // pred_check
      _
    $region19: #{my_sequential_forward.1} parent=1 // pred_check_branch
      %51 = sbr.rel (0) target = $region21
    $region20: #{my_sequential_forward.1} parent=1 // pred_region
      _
    $region21: #{my_sequential_forward.1} parent=1 // pred_fallthru
      _
    // Predicated region
    $region22: #{my_sequential_forward.1} parent=1 // pred_check
      _
    $region23: #{my_sequential_forward.1} parent=1 // pred_check_branch
      %53 = sbr.rel (0) target = $region25
    $region24: #{my_sequential_forward.1} parent=1 // pred_region
      %54 = dma.done [#allocation3], 22400
    $region25: #{my_sequential_forward.1} parent=1 // pred_fallthru
      _
    // Predicated region
    $region26: #{my_sequential_forward.1} parent=1 // pred_check
      _
    $region27: #{my_sequential_forward.1} parent=1 // pred_check_branch
      %56 = sbr.rel (0) target = $region29
    $region28: #{my_sequential_forward.1} parent=1 // pred_region
      %57 = dma.done [#allocation5], 12544
    $region29: #{my_sequential_forward.1} parent=1 // pred_fallthru
      _
    // Predicated region
    $region30: #{my_sequential_forward.1} parent=1 // pred_check
      _
    $region31: #{my_sequential_forward.1} parent=1 // pred_check_branch
      %59 = sbr.rel (0) target = $region33
    $region32: #{my_sequential_forward.1} parent=1 // pred_region
      %60 = dma.done [#allocation5], 4096
    $region33: #{my_sequential_forward.1} parent=1 // pred_fallthru
      _
    %v62 = vld [vmem:[#allocation2] sm:$0xff]
    %v63 = vld [vmem:[#allocation2 + $0x8] sm:$0xff]
    %v64 = vld [vmem:[#allocation2 + $0x10] sm:$0xff]
    %v65 = vld [vmem:[#allocation2 + $0x18] sm:$0xff]
    %v66 = vld [vmem:[#allocation2 + $0x20] sm:$0xff]
    %v67 = vld [vmem:[#allocation2 + $0x28] sm:$0xff]
    %v68 = vld [vmem:[#allocation2 + $0x30] sm:$0xff]
    %v69 = vld [vmem:[#allocation2 + $0x38] sm:$0xff]
    %v70 = vld [vmem:[#allocation2 + $0x40] sm:$0xff]
    %v71 = vld [vmem:[#allocation2 + $0x48] sm:$0xff]
    %v72 = vld [vmem:[#allocation2 + $0x50] sm:$0xff]
    %v73 = vld [vmem:[#allocation2 + $0x58] sm:$0xff]
    %v74 = vld [vmem:[#allocation2 + $0x60] sm:$0xff]
    %v75 = vld [vmem:[#allocation2 + $0x68] sm:$0xff]
    %v76 = vld [vmem:[#allocation2 + $0x70] sm:$0xff]
    %v77 = vld [vmem:[#allocation2 + $0x78] sm:$0xff]
    %v78 = vld [vmem:[#allocation2 + $0x80] sm:$0xff]
    %v79 = vld [vmem:[#allocation2 + $0x88] sm:$0xff]
    %v80 = vld [vmem:[#allocation2 + $0x90] sm:$0xff]
    %v81 = vld [vmem:[#allocation2 + $0x98] sm:$0xff]
    %v82 = vld [vmem:[#allocation2 + $0xa0] sm:$0xff]
    %v83 = vld [vmem:[#allocation2 + $0xa8] sm:$0xff]
    %v84 = vld [vmem:[#allocation2 + $0xb0] sm:$0xff]
    %v85 = vld [vmem:[#allocation2 + $0xb8] sm:$0xff]
    %v86 = vld [vmem:[#allocation2 + $0xc0] sm:$0xff]
    %v87 = vld [vmem:[#allocation2 + $0xc8] sm:$0xff]
    %v88 = vld [vmem:[#allocation2 + $0xd0] sm:$0xff]
    %v89 = vld [vmem:[#allocation2 + $0xd8] sm:$0xff]
    %v90 = vld [vmem:[#allocation2 + $0xe0] sm:$0xff]
    %v91 = vld [vmem:[#allocation2 + $0xe8] sm:$0xff]
    %v92 = vld [vmem:[#allocation2 + $0xf0] sm:$0xff]
    %v93 = vld [vmem:[#allocation2 + $0xf8] sm:$0xff]
    %v94 = vld [vmem:[#allocation2 + $0x100] sm:$0xff]
    %v95 = vld [vmem:[#allocation2 + $0x108] sm:$0xff]
    %v96 = vld [vmem:[#allocation2 + $0x110] sm:$0xff]
    %v97 = vld [vmem:[#allocation2 + $0x118] sm:$0xff]
    %v98 = vld [vmem:[#allocation2 + $0x120] sm:$0xff]
    %v99 = vld [vmem:[#allocation2 + $0x128] sm:$0xff]
    %v100 = vld [vmem:[#allocation2 + $0x130] sm:$0xff]
    %v101 = vld [vmem:[#allocation2 + $0x138] sm:$0xff]
    %v102 = vld [vmem:[#allocation2 + $0x140] sm:$0xff]
    %v103 = vld [vmem:[#allocation2 + $0x148] sm:$0xff]
    %v104 = vld [vmem:[#allocation2 + $0x150] sm:$0xff]
    %v105 = vld [vmem:[#allocation2 + $0x158] sm:$0xff]
    %v106 = vld [vmem:[#allocation2 + $0x160] sm:$0xff]
    %v107 = vld [vmem:[#allocation2 + $0x168] sm:$0xff]
    %v108 = vld [vmem:[#allocation2 + $0x170] sm:$0xff]
    %v109 = vld [vmem:[#allocation2 + $0x178] sm:$0xff]
    %v110 = vld [vmem:[#allocation2 + $0x180] sm:$0xff]
    %v111 = vld [vmem:[#allocation2 + $0x188] sm:$0xff]
    %v112 = vld [vmem:[#allocation2 + $0x190] sm:$0xff]
    %v113 = vld [vmem:[#allocation2 + $0x198] sm:$0xff]
    %v114 = vld [vmem:[#allocation2 + $0x1a0] sm:$0xff]
    %v115 = vld [vmem:[#allocation2 + $0x1a8] sm:$0xff]
    %v116 = vld [vmem:[#allocation2 + $0x1b0] sm:$0xff]
    %v117 = vld [vmem:[#allocation2 + $0x1b8] sm:$0xff]
    %v118 = vld [vmem:[#allocation2 + $0x1c0] sm:$0xff]
    %v119 = vld [vmem:[#allocation2 + $0x1c8] sm:$0xff]
    %v120 = vld [vmem:[#allocation2 + $0x1d0] sm:$0xff]
    %v121 = vld [vmem:[#allocation2 + $0x1d8] sm:$0xff]
    %v122 = vld [vmem:[#allocation2 + $0x1e0] sm:$0xff]
    %v123 = vld [vmem:[#allocation2 + $0x1e8] sm:$0xff]
    %v124 = vld [vmem:[#allocation2 + $0x1f0] sm:$0xff]
    %v125 = vld [vmem:[#allocation2 + $0x1f8] sm:$0xff]
    %v126 = vld [vmem:[#allocation2 + $0x200] sm:$0xff]
    %v127 = vld [vmem:[#allocation2 + $0x208] sm:$0xff]
    %v128 = vld [vmem:[#allocation2 + $0x210] sm:$0xff]
    %v129 = vld [vmem:[#allocation2 + $0x218] sm:$0xff]
    %v130 = vld [vmem:[#allocation2 + $0x220] sm:$0xff]
    %v131 = vld [vmem:[#allocation2 + $0x228] sm:$0xff]
    %v132 = vld [vmem:[#allocation2 + $0x230] sm:$0xff]
    %v133 = vld [vmem:[#allocation2 + $0x238] sm:$0xff]
    %v134 = vld [vmem:[#allocation2 + $0x240] sm:$0xff]
    %v135 = vld [vmem:[#allocation2 + $0x248] sm:$0xff]
    %v136 = vld [vmem:[#allocation2 + $0x250] sm:$0xff]
    %v137 = vld [vmem:[#allocation2 + $0x258] sm:$0xff]
    %v138 = vld [vmem:[#allocation2 + $0x260] sm:$0xff]
    %v139 = vld [vmem:[#allocation2 + $0x268] sm:$0xff]
    %v140 = vld [vmem:[#allocation2 + $0x270] sm:$0xff]
    %v141 = vld [vmem:[#allocation2 + $0x278] sm:$0xff]
    %v142 = vld [vmem:[#allocation2 + $0x280] sm:$0xff]
    %v143 = vld [vmem:[#allocation2 + $0x288] sm:$0xff]
    %v144 = vld [vmem:[#allocation2 + $0x290] sm:$0xff]
    %v145 = vld [vmem:[#allocation2 + $0x298] sm:$0xff]
    %v146 = vld [vmem:[#allocation2 + $0x2a0] sm:$0xff]
    %v147 = vld [vmem:[#allocation2 + $0x2a8] sm:$0xff]
    %v148 = vld [vmem:[#allocation2 + $0x2b0] sm:$0xff]
    %v149 = vld [vmem:[#allocation2 + $0x2b8] sm:$0xff]
    %v150 = vld [vmem:[#allocation2 + $0x2c0] sm:$0xff]
    %v151 = vld [vmem:[#allocation2 + $0x2c8] sm:$0xff]
    %v152 = vld [vmem:[#allocation2 + $0x2d0] sm:$0xff]
    %v153 = vld [vmem:[#allocation2 + $0x2d8] sm:$0xff]
    %v154 = vld [vmem:[#allocation2 + $0x2e0] sm:$0xff]
    %v155 = vld [vmem:[#allocation2 + $0x2e8] sm:$0xff]
    %v156 = vld [vmem:[#allocation2 + $0x2f0] sm:$0xff]
    %v157 = vld [vmem:[#allocation2 + $0x2f8] sm:$0xff]
    %v158 = vld [vmem:[#allocation2 + $0x300] sm:$0xff]
    %v159 = vld [vmem:[#allocation2 + $0x308] sm:$0xff]
    %v160 = vld [vmem:[#allocation2 + $0x310] sm:$0xff]
    %v161 = vld [vmem:[#allocation2 + $0x318] sm:$0xff]
    %v162 = vld [vmem:[#allocation2 + $0x320] sm:$0xff]
    %v163 = vld [vmem:[#allocation2 + $0x328] sm:$0xff]
    %v164 = vld [vmem:[#allocation2 + $0x330] sm:$0xff]
    %v165 = vld [vmem:[#allocation2 + $0x338] sm:$0xff]
    %v166 = vld [vmem:[#allocation2 + $0x340] sm:$0xff]
    %v167 = vld [vmem:[#allocation2 + $0x348] sm:$0xff]
    %v168 = vld [vmem:[#allocation2 + $0x350] sm:$0xff]
    %v169 = vld [vmem:[#allocation2 + $0x358] sm:$0xff]
    %v170 = vld [vmem:[#allocation2 + $0x360] sm:$0xff]
    %v171 = vld [vmem:[#allocation2 + $0x368] sm:$0xff]
    %v172 = vld [vmem:[#allocation2 + $0x370] sm:$0xff]
    %v173 = vld [vmem:[#allocation2 + $0x378] sm:$0xff]
    %v174 = vld [vmem:[#allocation2 + $0x380] sm:$0xff]
    %v175 = vld [vmem:[#allocation2 + $0x388] sm:$0xff]
    %v176 = vld [vmem:[#allocation2 + $0x390] sm:$0xff]
    %v177 = vld [vmem:[#allocation2 + $0x398] sm:$0xff]
    %v178 = vld [vmem:[#allocation2 + $0x3a0] sm:$0xff]
    %v179 = vld [vmem:[#allocation2 + $0x3a8] sm:$0xff]
    %v180 = vld [vmem:[#allocation2 + $0x3b0] sm:$0xff]
    %v181 = vld [vmem:[#allocation2 + $0x3b8] sm:$0xff]
    %v182 = vld [vmem:[#allocation2 + $0x3c0] sm:$0xff]
    %v183 = vld [vmem:[#allocation2 + $0x3c8] sm:$0xff]
    %v184 = vld [vmem:[#allocation2 + $0x3d0] sm:$0xff]
    %v185 = vld [vmem:[#allocation2 + $0x3d8] sm:$0xff]
    %v186 = vld [vmem:[#allocation2 + $0x3e0] sm:$0xff]
    %v187 = vld [vmem:[#allocation2 + $0x3e8] sm:$0xff]
    %v188 = vld [vmem:[#allocation2 + $0x3f0] sm:$0xff]
    %v189 = vld [vmem:[#allocation2 + $0x3f8] sm:$0xff]
    %v190 = vld [vmem:[#allocation2 + $0x400] sm:$0xff]
    %v191 = vld [vmem:[#allocation2 + $0x408] sm:$0xff]
    %v192 = vld [vmem:[#allocation2 + $0x410] sm:$0xff]
    %v193 = vld [vmem:[#allocation2 + $0x418] sm:$0xff]
    %v194 = vld [vmem:[#allocation2 + $0x420] sm:$0xff]
    %v195 = vld [vmem:[#allocation2 + $0x428] sm:$0xff]
    %v196 = vld [vmem:[#allocation2 + $0x430] sm:$0xff]
    %v197 = vld [vmem:[#allocation2 + $0x438] sm:$0xff]
    %v198 = vld [vmem:[#allocation2 + $0x440] sm:$0xff]
    %v199 = vld [vmem:[#allocation2 + $0x448] sm:$0xff]
    %v200 = vld [vmem:[#allocation2 + $0x450] sm:$0xff]
    %v201 = vld [vmem:[#allocation2 + $0x458] sm:$0xff]
    %v202 = vld [vmem:[#allocation2 + $0x460] sm:$0xff]
    %v203 = vld [vmem:[#allocation2 + $0x468] sm:$0xff]
    %v204 = vld [vmem:[#allocation2 + $0x470] sm:$0xff]
    %v205 = vld [vmem:[#allocation2 + $0x478] sm:$0xff]
    %v206 = vld [vmem:[#allocation2 + $0x480] sm:$0xff]
    %v207 = vld [vmem:[#allocation2 + $0x488] sm:$0xff]
    %v208 = vld [vmem:[#allocation2 + $0x490] sm:$0xff]
    %v209 = vld [vmem:[#allocation2 + $0x498] sm:$0xff]
    %v210 = vld [vmem:[#allocation2 + $0x4a0] sm:$0xff]
    %v211 = vld [vmem:[#allocation2 + $0x4a8] sm:$0xff]
    %v212 = vld [vmem:[#allocation2 + $0x4b0] sm:$0xff]
    %v213 = vld [vmem:[#allocation2 + $0x4b8] sm:$0xff]
    %v214 = vld [vmem:[#allocation2 + $0x4c0] sm:$0xff]
    %v215 = vld [vmem:[#allocation2 + $0x4c8] sm:$0xff]
    %v216 = vld [vmem:[#allocation2 + $0x4d0] sm:$0xff]
    %v217 = vld [vmem:[#allocation2 + $0x4d8] sm:$0xff]
    %v218 = vld [vmem:[#allocation2 + $0x4e0] sm:$0xff]
    %v219 = vld [vmem:[#allocation2 + $0x4e8] sm:$0xff]
    %v220 = vld [vmem:[#allocation2 + $0x4f0] sm:$0xff]
    %v221 = vld [vmem:[#allocation2 + $0x4f8] sm:$0xff]
    %v222 = vld [vmem:[#allocation2 + $0x500] sm:$0xff]
    %v223 = vld [vmem:[#allocation2 + $0x508] sm:$0xff]
    %v224 = vld [vmem:[#allocation2 + $0x510] sm:$0xff]
    %v225 = vld [vmem:[#allocation2 + $0x518] sm:$0xff]
    %v226 = vld [vmem:[#allocation2 + $0x520] sm:$0xff]
    %v227 = vld [vmem:[#allocation2 + $0x528] sm:$0xff]
    %v228 = vld [vmem:[#allocation2 + $0x530] sm:$0xff]
    %v229 = vld [vmem:[#allocation2 + $0x538] sm:$0xff]
    %v230 = vld [vmem:[#allocation2 + $0x540] sm:$0xff]
    %v231 = vld [vmem:[#allocation2 + $0x548] sm:$0xff]
    %v232 = vld [vmem:[#allocation2 + $0x550] sm:$0xff]
    %v233 = vld [vmem:[#allocation2 + $0x558] sm:$0xff]
    %v234 = vld [vmem:[#allocation2 + $0x560] sm:$0xff]
    %v235 = vld [vmem:[#allocation2 + $0x568] sm:$0xff]
    %v236 = vld [vmem:[#allocation2 + $0x570] sm:$0xff]
    %v237 = vpack.c.bf16 %v69, %v62
    %v238 = vpack.c.bf16 %v70, %v63
    %v239 = vpack.c.bf16 %v71, %v64
    %v240 = vpack.c.bf16 %v72, %v65
    %v241 = vpack.c.bf16 %v73, %v66
    %v242 = vpack.c.bf16 %v74, %v67
    %v243 = vpack.c.bf16 %v75, %v68
    %v244 = vpack.c.bf16 %v83, %v76
    %v245 = vpack.c.bf16 %v84, %v77
    %v246 = vpack.c.bf16 %v85, %v78
    %v247 = vpack.c.bf16 %v86, %v79
    %v248 = vpack.c.bf16 %v87, %v80
    %v249 = vpack.c.bf16 %v88, %v81
    %v250 = vpack.c.bf16 %v89, %v82
    %v251 = vpack.c.bf16 %v97, %v90
    %v252 = vpack.c.bf16 %v98, %v91
    %v253 = vpack.c.bf16 %v99, %v92
    %v254 = vpack.c.bf16 %v100, %v93
    %v255 = vpack.c.bf16 %v101, %v94
    %v256 = vpack.c.bf16 %v102, %v95
    %v257 = vpack.c.bf16 %v103, %v96
    %v258 = vpack.c.bf16 %v111, %v104
    %v259 = vpack.c.bf16 %v112, %v105
    %v260 = vpack.c.bf16 %v113, %v106
    %v261 = vpack.c.bf16 %v114, %v107
    %v262 = vpack.c.bf16 %v115, %v108
    %v263 = vpack.c.bf16 %v116, %v109
    %v264 = vpack.c.bf16 %v117, %v110
    %v265 = vpack.c.bf16 %v125, %v118
    %v266 = vpack.c.bf16 %v126, %v119
    %v267 = vpack.c.bf16 %v127, %v120
    %v268 = vpack.c.bf16 %v128, %v121
    %v269 = vpack.c.bf16 %v129, %v122
    %v270 = vpack.c.bf16 %v130, %v123
    %v271 = vpack.c.bf16 %v131, %v124
    %v272 = vpack.c.bf16 %v139, %v132
    %v273 = vpack.c.bf16 %v140, %v133
    %v274 = vpack.c.bf16 %v141, %v134
    %v275 = vpack.c.bf16 %v142, %v135
    %v276 = vpack.c.bf16 %v143, %v136
    %v277 = vpack.c.bf16 %v144, %v137
    %v278 = vpack.c.bf16 %v145, %v138
    %v279 = vpack.c.bf16 %v153, %v146
    %v280 = vpack.c.bf16 %v154, %v147
    %v281 = vpack.c.bf16 %v155, %v148
    %v282 = vpack.c.bf16 %v156, %v149
    %v283 = vpack.c.bf16 %v157, %v150
    %v284 = vpack.c.bf16 %v158, %v151
    %v285 = vpack.c.bf16 %v159, %v152
    %v286 = vpack.c.bf16 %v167, %v160
    %v287 = vpack.c.bf16 %v168, %v161
    %v288 = vpack.c.bf16 %v169, %v162
    %v289 = vpack.c.bf16 %v170, %v163
    %v290 = vpack.c.bf16 %v171, %v164
    %v291 = vpack.c.bf16 %v172, %v165
    %v292 = vpack.c.bf16 %v173, %v166
    %v293 = vpack.c.bf16 %v181, %v174
    %v294 = vpack.c.bf16 %v182, %v175
    %v295 = vpack.c.bf16 %v183, %v176
    %v296 = vpack.c.bf16 %v184, %v177
    %v297 = vpack.c.bf16 %v185, %v178
    %v298 = vpack.c.bf16 %v186, %v179
    %v299 = vpack.c.bf16 %v187, %v180
    %v300 = vpack.c.bf16 %v195, %v188
    %v301 = vpack.c.bf16 %v196, %v189
    %v302 = vpack.c.bf16 %v197, %v190
    %v303 = vpack.c.bf16 %v198, %v191
    %v304 = vpack.c.bf16 %v199, %v192
    %v305 = vpack.c.bf16 %v200, %v193
    %v306 = vpack.c.bf16 %v201, %v194
    %v307 = vpack.c.bf16 %v209, %v202
    %v308 = vpack.c.bf16 %v210, %v203
    %v309 = vpack.c.bf16 %v211, %v204
    %v310 = vpack.c.bf16 %v212, %v205
    %v311 = vpack.c.bf16 %v213, %v206
    %v312 = vpack.c.bf16 %v214, %v207
    %v313 = vpack.c.bf16 %v215, %v208
    %v314 = vpack.c.bf16 %v223, %v216
    %v315 = vpack.c.bf16 %v224, %v217
    %v316 = vpack.c.bf16 %v225, %v218
    %v317 = vpack.c.bf16 %v226, %v219
    %v318 = vpack.c.bf16 %v227, %v220
    %v319 = vpack.c.bf16 %v228, %v221
    %v320 = vpack.c.bf16 %v229, %v222
    %v321 = vpack.c.bf16 %v230, %v230
    %v322 = vpack.c.bf16 %v231, %v231
    %v323 = vpack.c.bf16 %v232, %v232
    %v324 = vpack.c.bf16 %v233, %v233
    %v325 = vpack.c.bf16 %v234, %v234
    %v326 = vpack.c.bf16 %v235, %v235
    %v327 = vpack.c.bf16 %v236, %v236
    %v328 = vld [vmem:[#allocation4] sm:$0xff]
    %v329 = vld [vmem:[#allocation4 + $0x8] sm:$0xff]
    %v330 = vld [vmem:[#allocation4 + $0x10] sm:$0xff]
    %v331 = vld [vmem:[#allocation4 + $0x18] sm:$0xff]
    %v332 = vld [vmem:[#allocation4 + $0x20] sm:$0xff]
    %v333 = vld [vmem:[#allocation4 + $0x28] sm:$0xff]
    %v334 = vld [vmem:[#allocation4 + $0x30] sm:$0xff]
    %v335 = vld [vmem:[#allocation4 + $0x38] sm:$0xff]
    %v336 = vld [vmem:[#allocation4 + $0x40] sm:$0xff]
    %v337 = vld [vmem:[#allocation4 + $0x48] sm:$0xff]
    %v338 = vld [vmem:[#allocation4 + $0x50] sm:$0xff]
    %v339 = vld [vmem:[#allocation4 + $0x58] sm:$0xff]
    %v340 = vld [vmem:[#allocation4 + $0x60] sm:$0xff]
    %v341 = vld [vmem:[#allocation4 + $0x68] sm:$0xff]
    %v342 = vld [vmem:[#allocation4 + $0x70] sm:$0xff]
    %v343 = vld [vmem:[#allocation4 + $0x78] sm:$0xff]
    %v344 = vld [vmem:[#allocation4 + $0x80] sm:$0xff]
    %v345 = vld [vmem:[#allocation4 + $0x88] sm:$0xff]
    %v346 = vld [vmem:[#allocation4 + $0x90] sm:$0xff]
    %v347 = vld [vmem:[#allocation4 + $0x98] sm:$0xff]
    %v348 = vld [vmem:[#allocation4 + $0xa0] sm:$0xff]
    %v349 = vld [vmem:[#allocation4 + $0xa8] sm:$0xff]
    %v350 = vld [vmem:[#allocation4 + $0xb0] sm:$0xff]
    %v351 = vld [vmem:[#allocation4 + $0xb8] sm:$0xff]
    %v352 = vld [vmem:[#allocation4 + $0xc0] sm:$0xff]
    %v353 = vld [vmem:[#allocation4 + $0xc8] sm:$0xff]
    %v354 = vld [vmem:[#allocation4 + $0xd0] sm:$0xff]
    %v355 = vld [vmem:[#allocation4 + $0xd8] sm:$0xff]
    %v356 = vld [vmem:[#allocation4 + $0xe0] sm:$0xff]
    %v357 = vld [vmem:[#allocation4 + $0xe8] sm:$0xff]
    %v358 = vld [vmem:[#allocation4 + $0xf0] sm:$0xff]
    %v359 = vld [vmem:[#allocation4 + $0xf8] sm:$0xff]
    %v360 = vld [vmem:[#allocation4 + $0x100] sm:$0xff]
    %v361 = vld [vmem:[#allocation4 + $0x108] sm:$0xff]
    %v362 = vld [vmem:[#allocation4 + $0x110] sm:$0xff]
    %v363 = vld [vmem:[#allocation4 + $0x118] sm:$0xff]
    %v364 = vld [vmem:[#allocation4 + $0x120] sm:$0xff]
    %v365 = vld [vmem:[#allocation4 + $0x128] sm:$0xff]
    %v366 = vld [vmem:[#allocation4 + $0x130] sm:$0xff]
    %v367 = vld [vmem:[#allocation4 + $0x138] sm:$0xff]
    %v368 = vld [vmem:[#allocation4 + $0x140] sm:$0xff]
    %v369 = vld [vmem:[#allocation4 + $0x148] sm:$0xff]
    %v370 = vld [vmem:[#allocation4 + $0x150] sm:$0xff]
    %v371 = vld [vmem:[#allocation4 + $0x158] sm:$0xff]
    %v372 = vld [vmem:[#allocation4 + $0x160] sm:$0xff]
    %v373 = vld [vmem:[#allocation4 + $0x168] sm:$0xff]
    %v374 = vld [vmem:[#allocation4 + $0x170] sm:$0xff]
    %v375 = vld [vmem:[#allocation4 + $0x178] sm:$0xff]
    %v376 = vld [vmem:[#allocation4 + $0x180] sm:$0xff]
    %v377 = vld [vmem:[#allocation4 + $0x188] sm:$0xff]
    %v378 = vld [vmem:[#allocation4 + $0x190] sm:$0xff]
    %v379 = vld [vmem:[#allocation4 + $0x198] sm:$0xff]
    %v380 = vld [vmem:[#allocation4 + $0x1a0] sm:$0xff]
    %v381 = vld [vmem:[#allocation4 + $0x1a8] sm:$0xff]
    %v382 = vld [vmem:[#allocation4 + $0x1b0] sm:$0xff]
    %v383 = vld [vmem:[#allocation4 + $0x1b8] sm:$0xff]
    %v384 = vld [vmem:[#allocation4 + $0x1c0] sm:$0xff]
    %v385 = vld [vmem:[#allocation4 + $0x1c8] sm:$0xff]
    %v386 = vld [vmem:[#allocation4 + $0x1d0] sm:$0xff]
    %v387 = vld [vmem:[#allocation4 + $0x1d8] sm:$0xff]
    %v388 = vld [vmem:[#allocation4 + $0x1e0] sm:$0xff]
    %v389 = vld [vmem:[#allocation4 + $0x1e8] sm:$0xff]
    %v390 = vld [vmem:[#allocation4 + $0x1f0] sm:$0xff]
    %v391 = vld [vmem:[#allocation4 + $0x1f8] sm:$0xff]
    %v392 = vld [vmem:[#allocation4 + $0x200] sm:$0xff]
    %v393 = vld [vmem:[#allocation4 + $0x208] sm:$0xff]
    %v394 = vld [vmem:[#allocation4 + $0x210] sm:$0xff]
    %v395 = vld [vmem:[#allocation4 + $0x218] sm:$0xff]
    %v396 = vld [vmem:[#allocation4 + $0x220] sm:$0xff]
    %v397 = vld [vmem:[#allocation4 + $0x228] sm:$0xff]
    %v398 = vld [vmem:[#allocation4 + $0x230] sm:$0xff]
    %v399 = vld [vmem:[#allocation4 + $0x238] sm:$0xff]
    %v400 = vld [vmem:[#allocation4 + $0x240] sm:$0xff]
    %v401 = vld [vmem:[#allocation4 + $0x248] sm:$0xff]
    %v402 = vld [vmem:[#allocation4 + $0x250] sm:$0xff]
    %v403 = vld [vmem:[#allocation4 + $0x258] sm:$0xff]
    %v404 = vld [vmem:[#allocation4 + $0x260] sm:$0xff]
    %v405 = vld [vmem:[#allocation4 + $0x268] sm:$0xff]
    %v406 = vld [vmem:[#allocation4 + $0x270] sm:$0xff]
    %v407 = vld [vmem:[#allocation4 + $0x278] sm:$0xff]
    %v408 = vld [vmem:[#allocation4 + $0x280] sm:$0xff]
    %v409 = vld [vmem:[#allocation4 + $0x288] sm:$0xff]
    %v410 = vld [vmem:[#allocation4 + $0x290] sm:$0xff]
    %v411 = vld [vmem:[#allocation4 + $0x298] sm:$0xff]
    %v412 = vld [vmem:[#allocation4 + $0x2a0] sm:$0xff]
    %v413 = vld [vmem:[#allocation4 + $0x2a8] sm:$0xff]
    %v414 = vld [vmem:[#allocation4 + $0x2b0] sm:$0xff]
    %v415 = vld [vmem:[#allocation4 + $0x2b8] sm:$0xff]
    %v416 = vld [vmem:[#allocation4 + $0x2c0] sm:$0xff]
    %v417 = vld [vmem:[#allocation4 + $0x2c8] sm:$0xff]
    %v418 = vld [vmem:[#allocation4 + $0x2d0] sm:$0xff]
    %v419 = vld [vmem:[#allocation4 + $0x2d8] sm:$0xff]
    %v420 = vld [vmem:[#allocation4 + $0x2e0] sm:$0xff]
    %v421 = vld [vmem:[#allocation4 + $0x2e8] sm:$0xff]
    %v422 = vld [vmem:[#allocation4 + $0x2f0] sm:$0xff]
    %v423 = vld [vmem:[#allocation4 + $0x2f8] sm:$0xff]
    %v424 = vld [vmem:[#allocation4 + $0x300] sm:$0xff]
    %v425 = vld [vmem:[#allocation4 + $0x308] sm:$0xff]
    %v426 = vld [vmem:[%s2] sm:$0x3]
    %v428 = vlaneseq
    %v429 = vshrl.u32 %v428, 7
    %v430 = vsub.s32 0, %v429
    %v431 = vrot.slane %v426, %v430
    %v432 = vlaneseq
    %v433 = vshrl.u32 %v432, 7
    %v434 = vsub.s32 1, %v433
    %v435 = vrot.slane %v426, %v434
    %v536 = vunpack.c.l.b16 %v328
    %v537 = vunpack.c.h.b16 %v328
    %v538 = vunpack.c.l.b16 %v329
    %v539 = vunpack.c.h.b16 %v329
    %v540 = vunpack.c.l.b16 %v330
    %v541 = vunpack.c.h.b16 %v330
    %v542 = vunpack.c.l.b16 %v331
    %v543 = vunpack.c.h.b16 %v331
    %v544 = vunpack.c.l.b16 %v332
    %v545 = vunpack.c.h.b16 %v332
    %v546 = vunpack.c.l.b16 %v333
    %v547 = vunpack.c.h.b16 %v333
    %v548 = vunpack.c.l.b16 %v334
    %v549 = vunpack.c.h.b16 %v334
    %v550 = vunpack.c.l.b16 %v335
    %v551 = vunpack.c.h.b16 %v335
    %v552 = vunpack.c.l.b16 %v336
    %v553 = vunpack.c.h.b16 %v336
    %v554 = vunpack.c.l.b16 %v337
    %v555 = vunpack.c.h.b16 %v337
    %v556 = vunpack.c.l.b16 %v338
    %v557 = vunpack.c.h.b16 %v338
    %v558 = vunpack.c.l.b16 %v339
    %v559 = vunpack.c.h.b16 %v339
    %v560 = vunpack.c.l.b16 %v340
    %v561 = vunpack.c.h.b16 %v340
    %v562 = vunpack.c.l.b16 %v341
    %v563 = vunpack.c.h.b16 %v341
    %v564 = vunpack.c.l.b16 %v342
    %v565 = vunpack.c.h.b16 %v342
    %v566 = vunpack.c.l.b16 %v343
    %v567 = vunpack.c.h.b16 %v343
    %v568 = vunpack.c.l.b16 %v344
    %v569 = vunpack.c.h.b16 %v344
    %v570 = vunpack.c.l.b16 %v345
    %v571 = vunpack.c.h.b16 %v345
    %v572 = vunpack.c.l.b16 %v346
    %v573 = vunpack.c.h.b16 %v346
    %v574 = vunpack.c.l.b16 %v347
    %v575 = vunpack.c.h.b16 %v347
    %v576 = vunpack.c.l.b16 %v348
    %v577 = vunpack.c.h.b16 %v348
    %v578 = vunpack.c.l.b16 %v349
    %v579 = vunpack.c.h.b16 %v349
    %v580 = vunpack.c.l.b16 %v350
    %v581 = vunpack.c.h.b16 %v350
    %v582 = vunpack.c.l.b16 %v351
    %v583 = vunpack.c.h.b16 %v351
    %v584 = vunpack.c.l.b16 %v352
    %v585 = vunpack.c.h.b16 %v352
    %v586 = vunpack.c.l.b16 %v353
    %v587 = vunpack.c.h.b16 %v353
    %v588 = vunpack.c.l.b16 %v354
    %v589 = vunpack.c.h.b16 %v354
    %v590 = vunpack.c.l.b16 %v355
    %v591 = vunpack.c.h.b16 %v355
    %v592 = vunpack.c.l.b16 %v356
    %v593 = vunpack.c.h.b16 %v356
    %v594 = vunpack.c.l.b16 %v357
    %v595 = vunpack.c.h.b16 %v357
    %v596 = vunpack.c.l.b16 %v358
    %v597 = vunpack.c.h.b16 %v358
    %v598 = vunpack.c.l.b16 %v359
    %v599 = vunpack.c.h.b16 %v359
    %v600 = vunpack.c.l.b16 %v360
    %v601 = vunpack.c.h.b16 %v360
    %v602 = vunpack.c.l.b16 %v361
    %v603 = vunpack.c.h.b16 %v361
    %v604 = vunpack.c.l.b16 %v362
    %v605 = vunpack.c.h.b16 %v362
    %v606 = vunpack.c.l.b16 %v363
    %v607 = vunpack.c.h.b16 %v363
    %v608 = vunpack.c.l.b16 %v364
    %v609 = vunpack.c.h.b16 %v364
    %v610 = vunpack.c.l.b16 %v365
    %v611 = vunpack.c.h.b16 %v365
    %v612 = vunpack.c.l.b16 %v366
    %v613 = vunpack.c.h.b16 %v366
    %v614 = vunpack.c.l.b16 %v367
    %v615 = vunpack.c.h.b16 %v367
    %v616 = vunpack.c.l.b16 %v368
    %v617 = vunpack.c.h.b16 %v368
    %v618 = vunpack.c.l.b16 %v369
    %v619 = vunpack.c.h.b16 %v369
    %v620 = vunpack.c.l.b16 %v370
    %v621 = vunpack.c.h.b16 %v370
    %v622 = vunpack.c.l.b16 %v371
    %v623 = vunpack.c.h.b16 %v371
    %v624 = vunpack.c.l.b16 %v372
    %v625 = vunpack.c.h.b16 %v372
    %v626 = vunpack.c.l.b16 %v373
    %v627 = vunpack.c.h.b16 %v373
    %v628 = vunpack.c.l.b16 %v374
    %v629 = vunpack.c.h.b16 %v374
    %v630 = vunpack.c.l.b16 %v375
    %v631 = vunpack.c.h.b16 %v375
    %v632 = vunpack.c.l.b16 %v376
    %v633 = vunpack.c.h.b16 %v376
    %v634 = vunpack.c.l.b16 %v377
    %v635 = vunpack.c.h.b16 %v377
    %v636 = vunpack.c.l.b16 %v378
    %v637 = vunpack.c.h.b16 %v378
    %v638 = vunpack.c.l.b16 %v379
    %v639 = vunpack.c.h.b16 %v379
    %v640 = vunpack.c.l.b16 %v380
    %v641 = vunpack.c.h.b16 %v380
    %v642 = vunpack.c.l.b16 %v381
    %v643 = vunpack.c.h.b16 %v381
    %v644 = vunpack.c.l.b16 %v382
    %v645 = vunpack.c.h.b16 %v382
    %v646 = vunpack.c.l.b16 %v383
    %v647 = vunpack.c.h.b16 %v383
    %v648 = vunpack.c.l.b16 %v384
    %v649 = vunpack.c.h.b16 %v384
    %v650 = vunpack.c.l.b16 %v385
    %v651 = vunpack.c.h.b16 %v385
    %v652 = vunpack.c.l.b16 %v386
    %v653 = vunpack.c.h.b16 %v386
    %v654 = vunpack.c.l.b16 %v387
    %v655 = vunpack.c.h.b16 %v387
    %v656 = vunpack.c.l.b16 %v388
    %v657 = vunpack.c.h.b16 %v388
    %v658 = vunpack.c.l.b16 %v389
    %v659 = vunpack.c.h.b16 %v389
    %v660 = vunpack.c.l.b16 %v390
    %v661 = vunpack.c.h.b16 %v390
    %v662 = vunpack.c.l.b16 %v391
    %v663 = vunpack.c.h.b16 %v391
    %v664 = vunpack.c.l.b16 %v392
    %v665 = vunpack.c.h.b16 %v392
    %v666 = vunpack.c.l.b16 %v393
    %v667 = vunpack.c.h.b16 %v393
    %v668 = vunpack.c.l.b16 %v394
    %v669 = vunpack.c.h.b16 %v394
    %v670 = vunpack.c.l.b16 %v395
    %v671 = vunpack.c.h.b16 %v395
    %v672 = vunpack.c.l.b16 %v396
    %v673 = vunpack.c.h.b16 %v396
    %v674 = vunpack.c.l.b16 %v397
    %v675 = vunpack.c.h.b16 %v397
    %v676 = vunpack.c.l.b16 %v398
    %v677 = vunpack.c.h.b16 %v398
    %v678 = vunpack.c.l.b16 %v399
    %v679 = vunpack.c.h.b16 %v399
    %v680 = vunpack.c.l.b16 %v400
    %v681 = vunpack.c.h.b16 %v400
    %v682 = vunpack.c.l.b16 %v401
    %v683 = vunpack.c.h.b16 %v401
    %v684 = vunpack.c.l.b16 %v402
    %v685 = vunpack.c.h.b16 %v402
    %v686 = vunpack.c.l.b16 %v403
    %v687 = vunpack.c.h.b16 %v403
    %v688 = vunpack.c.l.b16 %v404
    %v689 = vunpack.c.h.b16 %v404
    %v690 = vunpack.c.l.b16 %v405
    %v691 = vunpack.c.h.b16 %v405
    %v692 = vunpack.c.l.b16 %v406
    %v693 = vunpack.c.h.b16 %v406
    %v694 = vunpack.c.l.b16 %v407
    %v695 = vunpack.c.h.b16 %v407
    %v696 = vunpack.c.l.b16 %v408
    %v697 = vunpack.c.h.b16 %v408
    %v698 = vunpack.c.l.b16 %v409
    %v699 = vunpack.c.h.b16 %v409
    %v700 = vunpack.c.l.b16 %v410
    %v701 = vunpack.c.h.b16 %v410
    %v702 = vunpack.c.l.b16 %v411
    %v703 = vunpack.c.h.b16 %v411
    %v704 = vunpack.c.l.b16 %v412
    %v705 = vunpack.c.h.b16 %v412
    %v706 = vunpack.c.l.b16 %v413
    %v707 = vunpack.c.h.b16 %v413
    %v708 = vunpack.c.l.b16 %v414
    %v709 = vunpack.c.h.b16 %v414
    %v710 = vunpack.c.l.b16 %v415
    %v711 = vunpack.c.h.b16 %v415
    %v712 = vunpack.c.l.b16 %v416
    %v713 = vunpack.c.h.b16 %v416
    %v714 = vunpack.c.l.b16 %v417
    %v715 = vunpack.c.h.b16 %v417
    %v716 = vunpack.c.l.b16 %v418
    %v717 = vunpack.c.h.b16 %v418
    %v718 = vunpack.c.l.b16 %v419
    %v719 = vunpack.c.h.b16 %v419
    %v720 = vunpack.c.l.b16 %v420
    %v721 = vunpack.c.h.b16 %v420
    %v722 = vunpack.c.l.b16 %v421
    %v723 = vunpack.c.h.b16 %v421
    %v724 = vunpack.c.l.b16 %v422
    %v725 = vunpack.c.h.b16 %v422
    %v726 = vunpack.c.l.b16 %v423
    %v727 = vunpack.c.h.b16 %v423
    %v728 = vunpack.c.l.b16 %v424
    %v729 = vunpack.c.h.b16 %v424
    %v730 = vunpack.c.l.b16 %v425
    %v731 = vunpack.c.h.b16 %v425
    %v732 = vpack.c.b16 %v538, %v536
    %v733 = vpack.c.b16 %v539, %v537
    %v734 = vpack.c.b16 %v542, %v540
    %v735 = vpack.c.b16 %v543, %v541
    %v736 = vpack.c.b16 %v546, %v544
    %v737 = vpack.c.b16 %v547, %v545
    %v738 = vpack.c.b16 %v550, %v548
    %v739 = vpack.c.b16 %v551, %v549
    %v740 = vpack.c.b16 %v554, %v552
    %v741 = vpack.c.b16 %v555, %v553
    %v742 = vpack.c.b16 %v558, %v556
    %v743 = vpack.c.b16 %v559, %v557
    %v744 = vpack.c.b16 %v562, %v560
    %v745 = vpack.c.b16 %v563, %v561
    %v746 = vpack.c.b16 %v566, %v564
    %v747 = vpack.c.b16 %v567, %v565
    %v748 = vpack.c.b16 %v570, %v568
    %v749 = vpack.c.b16 %v571, %v569
    %v750 = vpack.c.b16 %v574, %v572
    %v751 = vpack.c.b16 %v575, %v573
    %v752 = vpack.c.b16 %v578, %v576
    %v753 = vpack.c.b16 %v579, %v577
    %v754 = vpack.c.b16 %v582, %v580
    %v755 = vpack.c.b16 %v583, %v581
    %v756 = vpack.c.b16 %v586, %v584
    %v757 = vpack.c.b16 %v587, %v585
    %v758 = vpack.c.b16 %v590, %v588
    %v759 = vpack.c.b16 %v591, %v589
    %v760 = vpack.c.b16 %v594, %v592
    %v761 = vpack.c.b16 %v595, %v593
    %v762 = vpack.c.b16 %v598, %v596
    %v763 = vpack.c.b16 %v599, %v597
    %v764 = vpack.c.b16 %v602, %v600
    %v765 = vpack.c.b16 %v603, %v601
    %v766 = vpack.c.b16 %v606, %v604
    %v767 = vpack.c.b16 %v607, %v605
    %v768 = vpack.c.b16 %v610, %v608
    %v769 = vpack.c.b16 %v611, %v609
    %v770 = vpack.c.b16 %v614, %v612
    %v771 = vpack.c.b16 %v615, %v613
    %v772 = vpack.c.b16 %v618, %v616
    %v773 = vpack.c.b16 %v619, %v617
    %v774 = vpack.c.b16 %v622, %v620
    %v775 = vpack.c.b16 %v623, %v621
    %v776 = vpack.c.b16 %v626, %v624
    %v777 = vpack.c.b16 %v627, %v625
    %v778 = vpack.c.b16 %v630, %v628
    %v779 = vpack.c.b16 %v631, %v629
    %v780 = vpack.c.b16 %v634, %v632
    %v781 = vpack.c.b16 %v635, %v633
    %v782 = vpack.c.b16 %v638, %v636
    %v783 = vpack.c.b16 %v639, %v637
    %v784 = vpack.c.b16 %v642, %v640
    %v785 = vpack.c.b16 %v643, %v641
    %v786 = vpack.c.b16 %v646, %v644
    %v787 = vpack.c.b16 %v647, %v645
    %v788 = vpack.c.b16 %v650, %v648
    %v789 = vpack.c.b16 %v651, %v649
    %v790 = vpack.c.b16 %v654, %v652
    %v791 = vpack.c.b16 %v655, %v653
    %v792 = vpack.c.b16 %v658, %v656
    %v793 = vpack.c.b16 %v659, %v657
    %v794 = vpack.c.b16 %v662, %v660
    %v795 = vpack.c.b16 %v663, %v661
    %v796 = vpack.c.b16 %v666, %v664
    %v797 = vpack.c.b16 %v667, %v665
    %v798 = vpack.c.b16 %v670, %v668
    %v799 = vpack.c.b16 %v671, %v669
    %v800 = vpack.c.b16 %v674, %v672
    %v801 = vpack.c.b16 %v675, %v673
    %v802 = vpack.c.b16 %v678, %v676
    %v803 = vpack.c.b16 %v679, %v677
    %v804 = vpack.c.b16 %v682, %v680
    %v805 = vpack.c.b16 %v683, %v681
    %v806 = vpack.c.b16 %v686, %v684
    %v807 = vpack.c.b16 %v687, %v685
    %v808 = vpack.c.b16 %v690, %v688
    %v809 = vpack.c.b16 %v691, %v689
    %v810 = vpack.c.b16 %v694, %v692
    %v811 = vpack.c.b16 %v695, %v693
    %v812 = vpack.c.b16 %v698, %v696
    %v813 = vpack.c.b16 %v699, %v697
    %v814 = vpack.c.b16 %v702, %v700
    %v815 = vpack.c.b16 %v703, %v701
    %v816 = vpack.c.b16 %v706, %v704
    %v817 = vpack.c.b16 %v707, %v705
    %v818 = vpack.c.b16 %v710, %v708
    %v819 = vpack.c.b16 %v711, %v709
    %v820 = vpack.c.b16 %v714, %v712
    %v821 = vpack.c.b16 %v715, %v713
    %v822 = vpack.c.b16 %v718, %v716
    %v823 = vpack.c.b16 %v719, %v717
    %v824 = vpack.c.b16 %v722, %v720
    %v825 = vpack.c.b16 %v723, %v721
    %v826 = vpack.c.b16 %v726, %v724
    %v827 = vpack.c.b16 %v727, %v725
    %v828 = vpack.c.b16 %v730, %v728
    %v829 = vpack.c.b16 %v731, %v729
    %vm928 = vcmask 130048
    %v930 = vsel %vm928, %v243, 0
    %v933 = vsel %vm928, %v250, 0
    %v936 = vsel %vm928, %v257, 0
    %v939 = vsel %vm928, %v264, 0
    %v942 = vsel %vm928, %v271, 0
    %v945 = vsel %vm928, %v278, 0
    %v948 = vsel %vm928, %v285, 0
    %v951 = vsel %vm928, %v292, 0
    %v954 = vsel %vm928, %v299, 0
    %v957 = vsel %vm928, %v306, 0
    %v960 = vsel %vm928, %v313, 0
    %v963 = vsel %vm928, %v320, 0
    %v966 = vsel %vm928, %v327, 0
    %968 = vmatprep.subr.bf16.mxu0 %v747
    %969 = vmatpush1.bf16.msra.mxu0 %v746
    %970 = vmatprep.subr.bf16.mxu0 %v745
    %971 = vmatpush1.bf16.msra.mxu0 %v744
    %972 = vmatprep.subr.bf16.mxu0 %v743
    %973 = vmatpush1.bf16.msra.mxu0 %v742
    %974 = vmatprep.subr.bf16.mxu0 %v741
    %975 = vmatpush1.bf16.msra.mxu0 %v740
    %976 = vmatprep.subr.bf16.mxu0 %v739
    %977 = vmatpush1.bf16.msra.mxu0 %v738
    %978 = vmatprep.subr.bf16.mxu0 %v737
    %979 = vmatpush1.bf16.msra.mxu0 %v736
    %980 = vmatprep.subr.bf16.mxu0 %v735
    %981 = vmatpush1.bf16.msra.mxu0 %v734
    %982 = vmatprep.subr.bf16.mxu0 %v733
    %983 = vmatpush1.bf16.msra.mxu0 %v732
    %984 = vmatprep.subr.bf16.mxu0 %v763
    %985 = vmatpush2.bf16.msra.mxu0 %v762
    %986 = vmatprep.subr.bf16.mxu0 %v761
    %987 = vmatpush2.bf16.msra.mxu0 %v760
    %988 = vmatprep.subr.bf16.mxu0 %v759
    %989 = vmatpush2.bf16.msra.mxu0 %v758
    %990 = vmatprep.subr.bf16.mxu0 %v757
    %991 = vmatpush2.bf16.msra.mxu0 %v756
    %992 = vmatprep.subr.bf16.mxu0 %v755
    %993 = vmatpush2.bf16.msra.mxu0 %v754
    %994 = vmatprep.subr.bf16.mxu0 %v753
    %995 = vmatpush2.bf16.msra.mxu0 %v752
    %996 = vmatprep.subr.bf16.mxu0 %v751
    %997 = vmatpush2.bf16.msra.mxu0 %v750
    %998 = vmatprep.subr.bf16.mxu0 %v749
    %999 = vmatpush2.bf16.msra.mxu0 %v748
    %1000 = vmatprep.mubr.bf16.mxu0 %v238
    %1001 = vmatmul.mubr.bf16.gmra.mxu0 %v237
    %v1002 = vpop.f32.mrf.mxu0
    %v1003 = vadd.f32 %v431, %v1002
    %v1004 = vpop.f32.mrf.mxu0
    %v1005 = vadd.f32 %v435, %v1004
    %v1006 = vpop.f32.mrf.mxu0
    %v1007 = vadd.f32 %v431, %v1006
    %v1008 = vpop.f32.mrf.mxu0
    %v1009 = vadd.f32 %v435, %v1008
    %1010 = vmatprep.mubr.bf16.mxu0 %v245
    %1011 = vmatmul.mubr.bf16.gmra.mxu0 %v244
    %v1012 = vpop.f32.mrf.mxu0
    %v1013 = vadd.f32 %v431, %v1012
    %v1014 = vpop.f32.mrf.mxu0
    %v1015 = vadd.f32 %v435, %v1014
    %v1016 = vpop.f32.mrf.mxu0
    %v1017 = vadd.f32 %v431, %v1016
    %v1018 = vpop.f32.mrf.mxu0
    %v1019 = vadd.f32 %v435, %v1018
    %1020 = vmatprep.mubr.bf16.mxu0 %v252
    %1021 = vmatmul.mubr.bf16.gmra.mxu0 %v251
    %v1022 = vpop.f32.mrf.mxu0
    %v1023 = vadd.f32 %v431, %v1022
    %v1024 = vpop.f32.mrf.mxu0
    %v1025 = vadd.f32 %v435, %v1024
    %v1026 = vpop.f32.mrf.mxu0
    %v1027 = vadd.f32 %v431, %v1026
    %v1028 = vpop.f32.mrf.mxu0
    %v1029 = vadd.f32 %v435, %v1028
    %1030 = vmatprep.mubr.bf16.mxu0 %v259
    %1031 = vmatmul.mubr.bf16.gmra.mxu0 %v258
    %v1032 = vpop.f32.mrf.mxu0
    %v1033 = vadd.f32 %v431, %v1032
    %v1034 = vpop.f32.mrf.mxu0
    %v1035 = vadd.f32 %v435, %v1034
    %v1036 = vpop.f32.mrf.mxu0
    %v1037 = vadd.f32 %v431, %v1036
    %v1038 = vpop.f32.mrf.mxu0
    %v1039 = vadd.f32 %v435, %v1038
    %1040 = vmatprep.mubr.bf16.mxu0 %v266
    %1041 = vmatmul.mubr.bf16.gmra.mxu0 %v265
    %v1042 = vpop.f32.mrf.mxu0
    %v1043 = vadd.f32 %v431, %v1042
    %v1044 = vpop.f32.mrf.mxu0
    %v1045 = vadd.f32 %v435, %v1044
    %v1046 = vpop.f32.mrf.mxu0
    %v1047 = vadd.f32 %v431, %v1046
    %v1048 = vpop.f32.mrf.mxu0
    %v1049 = vadd.f32 %v435, %v1048
    %1050 = vmatprep.mubr.bf16.mxu0 %v273
    %1051 = vmatmul.mubr.bf16.gmra.mxu0 %v272
    %v1052 = vpop.f32.mrf.mxu0
    %v1053 = vadd.f32 %v431, %v1052
    %v1054 = vpop.f32.mrf.mxu0
    %v1055 = vadd.f32 %v435, %v1054
    %v1056 = vpop.f32.mrf.mxu0
    %v1057 = vadd.f32 %v431, %v1056
    %v1058 = vpop.f32.mrf.mxu0
    %v1059 = vadd.f32 %v435, %v1058
    %1060 = vmatprep.mubr.bf16.mxu0 %v280
    %1061 = vmatmul.mubr.bf16.gmra.mxu0 %v279
    %v1062 = vpop.f32.mrf.mxu0
    %v1063 = vadd.f32 %v431, %v1062
    %v1064 = vpop.f32.mrf.mxu0
    %v1065 = vadd.f32 %v435, %v1064
    %v1066 = vpop.f32.mrf.mxu0
    %v1067 = vadd.f32 %v431, %v1066
    %v1068 = vpop.f32.mrf.mxu0
    %v1069 = vadd.f32 %v435, %v1068
    %1070 = vmatprep.mubr.bf16.mxu0 %v287
    %1071 = vmatmul.mubr.bf16.gmra.mxu0 %v286
    %v1072 = vpop.f32.mrf.mxu0
    %v1073 = vadd.f32 %v431, %v1072
    %v1074 = vpop.f32.mrf.mxu0
    %v1075 = vadd.f32 %v435, %v1074
    %v1076 = vpop.f32.mrf.mxu0
    %v1077 = vadd.f32 %v431, %v1076
    %v1078 = vpop.f32.mrf.mxu0
    %v1079 = vadd.f32 %v435, %v1078
    %1080 = vmatprep.mubr.bf16.mxu0 %v294
    %1081 = vmatmul.mubr.bf16.gmra.mxu0 %v293
    %v1082 = vpop.f32.mrf.mxu0
    %v1083 = vadd.f32 %v431, %v1082
    %v1084 = vpop.f32.mrf.mxu0
    %v1085 = vadd.f32 %v435, %v1084
    %v1086 = vpop.f32.mrf.mxu0
    %v1087 = vadd.f32 %v431, %v1086
    %v1088 = vpop.f32.mrf.mxu0
    %v1089 = vadd.f32 %v435, %v1088
    %1090 = vmatprep.mubr.bf16.mxu0 %v301
    %1091 = vmatmul.mubr.bf16.gmra.mxu0 %v300
    %v1092 = vpop.f32.mrf.mxu0
    %v1093 = vadd.f32 %v431, %v1092
    %v1094 = vpop.f32.mrf.mxu0
    %v1095 = vadd.f32 %v435, %v1094
    %v1096 = vpop.f32.mrf.mxu0
    %v1097 = vadd.f32 %v431, %v1096
    %v1098 = vpop.f32.mrf.mxu0
    %v1099 = vadd.f32 %v435, %v1098
    %1100 = vmatprep.mubr.bf16.mxu0 %v308
    %1101 = vmatmul.mubr.bf16.gmra.mxu0 %v307
    %v1102 = vpop.f32.mrf.mxu0
    %v1103 = vadd.f32 %v431, %v1102
    %v1104 = vpop.f32.mrf.mxu0
    %v1105 = vadd.f32 %v435, %v1104
    %v1106 = vpop.f32.mrf.mxu0
    %v1107 = vadd.f32 %v431, %v1106
    %v1108 = vpop.f32.mrf.mxu0
    %v1109 = vadd.f32 %v435, %v1108
    %1110 = vmatprep.mubr.bf16.mxu0 %v315
    %1111 = vmatmul.mubr.bf16.gmra.mxu0 %v314
    %v1112 = vpop.f32.mrf.mxu0
    %v1113 = vadd.f32 %v431, %v1112
    %v1114 = vpop.f32.mrf.mxu0
    %v1115 = vadd.f32 %v435, %v1114
    %v1116 = vpop.f32.mrf.mxu0
    %v1117 = vadd.f32 %v431, %v1116
    %v1118 = vpop.f32.mrf.mxu0
    %v1119 = vadd.f32 %v435, %v1118
    %1120 = vmatprep.mubr.bf16.mxu0 %v322
    %1121 = vmatmul.mubr.bf16.gmra.mxu0 %v321
    %v1122 = vpop.f32.mrf.mxu0
    %v1123 = vadd.f32 %v431, %v1122
    %v1124 = vpop.f32.mrf.mxu0
    %v1125 = vadd.f32 %v435, %v1124
    %v1126 = vpop.f32.mrf.mxu0
    %v1127 = vpop.f32.mrf.mxu0
    %1128 = vdwg.mxu0
    %1129 = vmatprep.subr.bf16.mxu0 %v779
    %1130 = vmatpush1.bf16.msra.mxu0 %v778
    %1131 = vmatprep.subr.bf16.mxu0 %v777
    %1132 = vmatpush1.bf16.msra.mxu0 %v776
    %1133 = vmatprep.subr.bf16.mxu0 %v775
    %1134 = vmatpush1.bf16.msra.mxu0 %v774
    %1135 = vmatprep.subr.bf16.mxu0 %v773
    %1136 = vmatpush1.bf16.msra.mxu0 %v772
    %1137 = vmatprep.subr.bf16.mxu0 %v771
    %1138 = vmatpush1.bf16.msra.mxu0 %v770
    %1139 = vmatprep.subr.bf16.mxu0 %v769
    %1140 = vmatpush1.bf16.msra.mxu0 %v768
    %1141 = vmatprep.subr.bf16.mxu0 %v767
    %1142 = vmatpush1.bf16.msra.mxu0 %v766
    %1143 = vmatprep.subr.bf16.mxu0 %v765
    %1144 = vmatpush1.bf16.msra.mxu0 %v764
    %1145 = vmatprep.subr.bf16.mxu0 %v795
    %1146 = vmatpush2.bf16.msra.mxu0 %v794
    %1147 = vmatprep.subr.bf16.mxu0 %v793
    %1148 = vmatpush2.bf16.msra.mxu0 %v792
    %1149 = vmatprep.subr.bf16.mxu0 %v791
    %1150 = vmatpush2.bf16.msra.mxu0 %v790
    %1151 = vmatprep.subr.bf16.mxu0 %v789
    %1152 = vmatpush2.bf16.msra.mxu0 %v788
    %1153 = vmatprep.subr.bf16.mxu0 %v787
    %1154 = vmatpush2.bf16.msra.mxu0 %v786
    %1155 = vmatprep.subr.bf16.mxu0 %v785
    %1156 = vmatpush2.bf16.msra.mxu0 %v784
    %1157 = vmatprep.subr.bf16.mxu0 %v783
    %1158 = vmatpush2.bf16.msra.mxu0 %v782
    %1159 = vmatprep.subr.bf16.mxu0 %v781
    %1160 = vmatpush2.bf16.msra.mxu0 %v780
    %1161 = vmatprep.mubr.bf16.mxu0 %v240
    %1162 = vmatmul.mubr.bf16.gmra.mxu0 %v239
    %v1163 = vpop.f32.mrf.mxu0
    %v1164 = vadd.f32 %v1003, %v1163
    %v1165 = vpop.f32.mrf.mxu0
    %v1166 = vadd.f32 %v1005, %v1165
    %v1167 = vpop.f32.mrf.mxu0
    %v1168 = vadd.f32 %v1007, %v1167
    %v1169 = vpop.f32.mrf.mxu0
    %v1170 = vadd.f32 %v1009, %v1169
    %1171 = vmatprep.mubr.bf16.mxu0 %v247
    %1172 = vmatmul.mubr.bf16.gmra.mxu0 %v246
    %v1173 = vpop.f32.mrf.mxu0
    %v1174 = vadd.f32 %v1013, %v1173
    %v1175 = vpop.f32.mrf.mxu0
    %v1176 = vadd.f32 %v1015, %v1175
    %v1177 = vpop.f32.mrf.mxu0
    %v1178 = vadd.f32 %v1017, %v1177
    %v1179 = vpop.f32.mrf.mxu0
    %v1180 = vadd.f32 %v1019, %v1179
    %1181 = vmatprep.mubr.bf16.mxu0 %v254
    %1182 = vmatmul.mubr.bf16.gmra.mxu0 %v253
    %v1183 = vpop.f32.mrf.mxu0
    %v1184 = vadd.f32 %v1023, %v1183
    %v1185 = vpop.f32.mrf.mxu0
    %v1186 = vadd.f32 %v1025, %v1185
    %v1187 = vpop.f32.mrf.mxu0
    %v1188 = vadd.f32 %v1027, %v1187
    %v1189 = vpop.f32.mrf.mxu0
    %v1190 = vadd.f32 %v1029, %v1189
    %1191 = vmatprep.mubr.bf16.mxu0 %v261
    %1192 = vmatmul.mubr.bf16.gmra.mxu0 %v260
    %v1193 = vpop.f32.mrf.mxu0
    %v1194 = vadd.f32 %v1033, %v1193
    %v1195 = vpop.f32.mrf.mxu0
    %v1196 = vadd.f32 %v1035, %v1195
    %v1197 = vpop.f32.mrf.mxu0
    %v1198 = vadd.f32 %v1037, %v1197
    %v1199 = vpop.f32.mrf.mxu0
    %v1200 = vadd.f32 %v1039, %v1199
    %1201 = vmatprep.mubr.bf16.mxu0 %v268
    %1202 = vmatmul.mubr.bf16.gmra.mxu0 %v267
    %v1203 = vpop.f32.mrf.mxu0
    %v1204 = vadd.f32 %v1043, %v1203
    %v1205 = vpop.f32.mrf.mxu0
    %v1206 = vadd.f32 %v1045, %v1205
    %v1207 = vpop.f32.mrf.mxu0
    %v1208 = vadd.f32 %v1047, %v1207
    %v1209 = vpop.f32.mrf.mxu0
    %v1210 = vadd.f32 %v1049, %v1209
    %1211 = vmatprep.mubr.bf16.mxu0 %v275
    %1212 = vmatmul.mubr.bf16.gmra.mxu0 %v274
    %v1213 = vpop.f32.mrf.mxu0
    %v1214 = vadd.f32 %v1053, %v1213
    %v1215 = vpop.f32.mrf.mxu0
    %v1216 = vadd.f32 %v1055, %v1215
    %v1217 = vpop.f32.mrf.mxu0
    %v1218 = vadd.f32 %v1057, %v1217
    %v1219 = vpop.f32.mrf.mxu0
    %v1220 = vadd.f32 %v1059, %v1219
    %1221 = vmatprep.mubr.bf16.mxu0 %v282
    %1222 = vmatmul.mubr.bf16.gmra.mxu0 %v281
    %v1223 = vpop.f32.mrf.mxu0
    %v1224 = vadd.f32 %v1063, %v1223
    %v1225 = vpop.f32.mrf.mxu0
    %v1226 = vadd.f32 %v1065, %v1225
    %v1227 = vpop.f32.mrf.mxu0
    %v1228 = vadd.f32 %v1067, %v1227
    %v1229 = vpop.f32.mrf.mxu0
    %v1230 = vadd.f32 %v1069, %v1229
    %1231 = vmatprep.mubr.bf16.mxu0 %v289
    %1232 = vmatmul.mubr.bf16.gmra.mxu0 %v288
    %v1233 = vpop.f32.mrf.mxu0
    %v1234 = vadd.f32 %v1073, %v1233
    %v1235 = vpop.f32.mrf.mxu0
    %v1236 = vadd.f32 %v1075, %v1235
    %v1237 = vpop.f32.mrf.mxu0
    %v1238 = vadd.f32 %v1077, %v1237
    %v1239 = vpop.f32.mrf.mxu0
    %v1240 = vadd.f32 %v1079, %v1239
    %1241 = vmatprep.mubr.bf16.mxu0 %v296
    %1242 = vmatmul.mubr.bf16.gmra.mxu0 %v295
    %v1243 = vpop.f32.mrf.mxu0
    %v1244 = vadd.f32 %v1083, %v1243
    %v1245 = vpop.f32.mrf.mxu0
    %v1246 = vadd.f32 %v1085, %v1245
    %v1247 = vpop.f32.mrf.mxu0
    %v1248 = vadd.f32 %v1087, %v1247
    %v1249 = vpop.f32.mrf.mxu0
    %v1250 = vadd.f32 %v1089, %v1249
    %1251 = vmatprep.mubr.bf16.mxu0 %v303
    %1252 = vmatmul.mubr.bf16.gmra.mxu0 %v302
    %v1253 = vpop.f32.mrf.mxu0
    %v1254 = vadd.f32 %v1093, %v1253
    %v1255 = vpop.f32.mrf.mxu0
    %v1256 = vadd.f32 %v1095, %v1255
    %v1257 = vpop.f32.mrf.mxu0
    %v1258 = vadd.f32 %v1097, %v1257
    %v1259 = vpop.f32.mrf.mxu0
    %v1260 = vadd.f32 %v1099, %v1259
    %1261 = vmatprep.mubr.bf16.mxu0 %v310
    %1262 = vmatmul.mubr.bf16.gmra.mxu0 %v309
    %v1263 = vpop.f32.mrf.mxu0
    %v1264 = vadd.f32 %v1103, %v1263
    %v1265 = vpop.f32.mrf.mxu0
    %v1266 = vadd.f32 %v1105, %v1265
    %v1267 = vpop.f32.mrf.mxu0
    %v1268 = vadd.f32 %v1107, %v1267
    %v1269 = vpop.f32.mrf.mxu0
    %v1270 = vadd.f32 %v1109, %v1269
    %1271 = vmatprep.mubr.bf16.mxu0 %v317
    %1272 = vmatmul.mubr.bf16.gmra.mxu0 %v316
    %v1273 = vpop.f32.mrf.mxu0
    %v1274 = vadd.f32 %v1113, %v1273
    %v1275 = vpop.f32.mrf.mxu0
    %v1276 = vadd.f32 %v1115, %v1275
    %v1277 = vpop.f32.mrf.mxu0
    %v1278 = vadd.f32 %v1117, %v1277
    %v1279 = vpop.f32.mrf.mxu0
    %v1280 = vadd.f32 %v1119, %v1279
    %1281 = vmatprep.mubr.bf16.mxu0 %v324
    %1282 = vmatmul.mubr.bf16.gmra.mxu0 %v323
    %v1283 = vpop.f32.mrf.mxu0
    %v1284 = vadd.f32 %v1123, %v1283
    %v1285 = vpop.f32.mrf.mxu0
    %v1286 = vadd.f32 %v1125, %v1285
    %v1287 = vpop.f32.mrf.mxu0
    %v1288 = vpop.f32.mrf.mxu0
    %1289 = vdwg.mxu0
    %1290 = vmatprep.subr.bf16.mxu0 %v811
    %1291 = vmatpush1.bf16.msra.mxu0 %v810
    %1292 = vmatprep.subr.bf16.mxu0 %v809
    %1293 = vmatpush1.bf16.msra.mxu0 %v808
    %1294 = vmatprep.subr.bf16.mxu0 %v807
    %1295 = vmatpush1.bf16.msra.mxu0 %v806
    %1296 = vmatprep.subr.bf16.mxu0 %v805
    %1297 = vmatpush1.bf16.msra.mxu0 %v804
    %1298 = vmatprep.subr.bf16.mxu0 %v803
    %1299 = vmatpush1.bf16.msra.mxu0 %v802
    %1300 = vmatprep.subr.bf16.mxu0 %v801
    %1301 = vmatpush1.bf16.msra.mxu0 %v800
    %1302 = vmatprep.subr.bf16.mxu0 %v799
    %1303 = vmatpush1.bf16.msra.mxu0 %v798
    %1304 = vmatprep.subr.bf16.mxu0 %v797
    %1305 = vmatpush1.bf16.msra.mxu0 %v796
    %1306 = vmatprep.subr.bf16.mxu0 %v827
    %1307 = vmatpush2.bf16.msra.mxu0 %v826
    %1308 = vmatprep.subr.bf16.mxu0 %v825
    %1309 = vmatpush2.bf16.msra.mxu0 %v824
    %1310 = vmatprep.subr.bf16.mxu0 %v823
    %1311 = vmatpush2.bf16.msra.mxu0 %v822
    %1312 = vmatprep.subr.bf16.mxu0 %v821
    %1313 = vmatpush2.bf16.msra.mxu0 %v820
    %1314 = vmatprep.subr.bf16.mxu0 %v819
    %1315 = vmatpush2.bf16.msra.mxu0 %v818
    %1316 = vmatprep.subr.bf16.mxu0 %v817
    %1317 = vmatpush2.bf16.msra.mxu0 %v816
    %1318 = vmatprep.subr.bf16.mxu0 %v815
    %1319 = vmatpush2.bf16.msra.mxu0 %v814
    %1320 = vmatprep.subr.bf16.mxu0 %v813
    %1321 = vmatpush2.bf16.msra.mxu0 %v812
    %1322 = vmatprep.mubr.bf16.mxu0 %v242
    %1323 = vmatmul.mubr.bf16.gmra.mxu0 %v241
    %v1324 = vpop.f32.mrf.mxu0
    %v1325 = vadd.f32 %v1164, %v1324
    %v1326 = vpop.f32.mrf.mxu0
    %v1327 = vadd.f32 %v1166, %v1326
    %v1328 = vpop.f32.mrf.mxu0
    %v1329 = vadd.f32 %v1168, %v1328
    %v1330 = vpop.f32.mrf.mxu0
    %v1331 = vadd.f32 %v1170, %v1330
    %1332 = vmatprep.mubr.bf16.mxu0 %v249
    %1333 = vmatmul.mubr.bf16.gmra.mxu0 %v248
    %v1334 = vpop.f32.mrf.mxu0
    %v1335 = vadd.f32 %v1174, %v1334
    %v1336 = vpop.f32.mrf.mxu0
    %v1337 = vadd.f32 %v1176, %v1336
    %v1338 = vpop.f32.mrf.mxu0
    %v1339 = vadd.f32 %v1178, %v1338
    %v1340 = vpop.f32.mrf.mxu0
    %v1341 = vadd.f32 %v1180, %v1340
    %1342 = vmatprep.mubr.bf16.mxu0 %v256
    %1343 = vmatmul.mubr.bf16.gmra.mxu0 %v255
    %v1344 = vpop.f32.mrf.mxu0
    %v1345 = vadd.f32 %v1184, %v1344
    %v1346 = vpop.f32.mrf.mxu0
    %v1347 = vadd.f32 %v1186, %v1346
    %v1348 = vpop.f32.mrf.mxu0
    %v1349 = vadd.f32 %v1188, %v1348
    %v1350 = vpop.f32.mrf.mxu0
    %v1351 = vadd.f32 %v1190, %v1350
    %1352 = vmatprep.mubr.bf16.mxu0 %v263
    %1353 = vmatmul.mubr.bf16.gmra.mxu0 %v262
    %v1354 = vpop.f32.mrf.mxu0
    %v1355 = vadd.f32 %v1194, %v1354
    %v1356 = vpop.f32.mrf.mxu0
    %v1357 = vadd.f32 %v1196, %v1356
    %v1358 = vpop.f32.mrf.mxu0
    %v1359 = vadd.f32 %v1198, %v1358
    %v1360 = vpop.f32.mrf.mxu0
    %v1361 = vadd.f32 %v1200, %v1360
    %1362 = vmatprep.mubr.bf16.mxu0 %v270
    %1363 = vmatmul.mubr.bf16.gmra.mxu0 %v269
    %v1364 = vpop.f32.mrf.mxu0
    %v1365 = vadd.f32 %v1204, %v1364
    %v1366 = vpop.f32.mrf.mxu0
    %v1367 = vadd.f32 %v1206, %v1366
    %v1368 = vpop.f32.mrf.mxu0
    %v1369 = vadd.f32 %v1208, %v1368
    %v1370 = vpop.f32.mrf.mxu0
    %v1371 = vadd.f32 %v1210, %v1370
    %1372 = vmatprep.mubr.bf16.mxu0 %v277
    %1373 = vmatmul.mubr.bf16.gmra.mxu0 %v276
    %v1374 = vpop.f32.mrf.mxu0
    %v1375 = vadd.f32 %v1214, %v1374
    %v1376 = vpop.f32.mrf.mxu0
    %v1377 = vadd.f32 %v1216, %v1376
    %v1378 = vpop.f32.mrf.mxu0
    %v1379 = vadd.f32 %v1218, %v1378
    %v1380 = vpop.f32.mrf.mxu0
    %v1381 = vadd.f32 %v1220, %v1380
    %1382 = vmatprep.mubr.bf16.mxu0 %v284
    %1383 = vmatmul.mubr.bf16.gmra.mxu0 %v283
    %v1384 = vpop.f32.mrf.mxu0
    %v1385 = vadd.f32 %v1224, %v1384
    %v1386 = vpop.f32.mrf.mxu0
    %v1387 = vadd.f32 %v1226, %v1386
    %v1388 = vpop.f32.mrf.mxu0
    %v1389 = vadd.f32 %v1228, %v1388
    %v1390 = vpop.f32.mrf.mxu0
    %v1391 = vadd.f32 %v1230, %v1390
    %1392 = vmatprep.mubr.bf16.mxu0 %v291
    %1393 = vmatmul.mubr.bf16.gmra.mxu0 %v290
    %v1394 = vpop.f32.mrf.mxu0
    %v1395 = vadd.f32 %v1234, %v1394
    %v1396 = vpop.f32.mrf.mxu0
    %v1397 = vadd.f32 %v1236, %v1396
    %v1398 = vpop.f32.mrf.mxu0
    %v1399 = vadd.f32 %v1238, %v1398
    %v1400 = vpop.f32.mrf.mxu0
    %v1401 = vadd.f32 %v1240, %v1400
    %1402 = vmatprep.mubr.bf16.mxu0 %v298
    %1403 = vmatmul.mubr.bf16.gmra.mxu0 %v297
    %v1404 = vpop.f32.mrf.mxu0
    %v1405 = vadd.f32 %v1244, %v1404
    %v1406 = vpop.f32.mrf.mxu0
    %v1407 = vadd.f32 %v1246, %v1406
    %v1408 = vpop.f32.mrf.mxu0
    %v1409 = vadd.f32 %v1248, %v1408
    %v1410 = vpop.f32.mrf.mxu0
    %v1411 = vadd.f32 %v1250, %v1410
    %1412 = vmatprep.mubr.bf16.mxu0 %v305
    %1413 = vmatmul.mubr.bf16.gmra.mxu0 %v304
    %v1414 = vpop.f32.mrf.mxu0
    %v1415 = vadd.f32 %v1254, %v1414
    %v1416 = vpop.f32.mrf.mxu0
    %v1417 = vadd.f32 %v1256, %v1416
    %v1418 = vpop.f32.mrf.mxu0
    %v1419 = vadd.f32 %v1258, %v1418
    %v1420 = vpop.f32.mrf.mxu0
    %v1421 = vadd.f32 %v1260, %v1420
    %1422 = vmatprep.mubr.bf16.mxu0 %v312
    %1423 = vmatmul.mubr.bf16.gmra.mxu0 %v311
    %v1424 = vpop.f32.mrf.mxu0
    %v1425 = vadd.f32 %v1264, %v1424
    %v1426 = vpop.f32.mrf.mxu0
    %v1427 = vadd.f32 %v1266, %v1426
    %v1428 = vpop.f32.mrf.mxu0
    %v1429 = vadd.f32 %v1268, %v1428
    %v1430 = vpop.f32.mrf.mxu0
    %v1431 = vadd.f32 %v1270, %v1430
    %1432 = vmatprep.mubr.bf16.mxu0 %v319
    %1433 = vmatmul.mubr.bf16.gmra.mxu0 %v318
    %v1434 = vpop.f32.mrf.mxu0
    %v1435 = vadd.f32 %v1274, %v1434
    %v1436 = vpop.f32.mrf.mxu0
    %v1437 = vadd.f32 %v1276, %v1436
    %v1438 = vpop.f32.mrf.mxu0
    %v1439 = vadd.f32 %v1278, %v1438
    %v1440 = vpop.f32.mrf.mxu0
    %v1441 = vadd.f32 %v1280, %v1440
    %1442 = vmatprep.mubr.bf16.mxu0 %v326
    %1443 = vmatmul.mubr.bf16.gmra.mxu0 %v325
    %v1444 = vpop.f32.mrf.mxu0
    %v1445 = vadd.f32 %v1284, %v1444
    %v1446 = vpop.f32.mrf.mxu0
    %v1447 = vadd.f32 %v1286, %v1446
    %v1448 = vpop.f32.mrf.mxu0
    %v1449 = vpop.f32.mrf.mxu0
    %1450 = vdwg.mxu0
    %1451 = vmatprep.subr.bf16.mxu0 0
    %1452 = vmatpush1.bf16.msra.mxu0 0
    %1453 = vmatprep.subr.bf16.mxu0 0
    %1454 = vmatpush1.bf16.msra.mxu0 0
    %1455 = vmatprep.subr.bf16.mxu0 0
    %1456 = vmatpush1.bf16.msra.mxu0 0
    %1457 = vmatprep.subr.bf16.mxu0 0
    %1458 = vmatpush1.bf16.msra.mxu0 0
    %1459 = vmatprep.subr.bf16.mxu0 0
    %1460 = vmatpush1.bf16.msra.mxu0 0
    %1461 = vmatprep.subr.bf16.mxu0 0
    %1462 = vmatpush1.bf16.msra.mxu0 0
    %1463 = vmatprep.subr.bf16.mxu0 0
    %1464 = vmatpush1.bf16.msra.mxu0 0
    %1465 = vmatprep.subr.bf16.mxu0 %v829
    %1466 = vmatpush1.bf16.msra.mxu0 %v828
    %1467 = vmatprep.subr.bf16.mxu0 0
    %1468 = vmatpush2.bf16.msra.mxu0 0
    %1469 = vmatprep.subr.bf16.mxu0 0
    %1470 = vmatpush2.bf16.msra.mxu0 0
    %1471 = vmatprep.subr.bf16.mxu0 0
    %1472 = vmatpush2.bf16.msra.mxu0 0
    %1473 = vmatprep.subr.bf16.mxu0 0
    %1474 = vmatpush2.bf16.msra.mxu0 0
    %1475 = vmatprep.subr.bf16.mxu0 0
    %1476 = vmatpush2.bf16.msra.mxu0 0
    %1477 = vmatprep.subr.bf16.mxu0 0
    %1478 = vmatpush2.bf16.msra.mxu0 0
    %1479 = vmatprep.subr.bf16.mxu0 0
    %1480 = vmatpush2.bf16.msra.mxu0 0
    %1481 = vmatprep.subr.bf16.mxu0 0
    %1482 = vmatpush2.bf16.msra.mxu0 0
    %1483 = vmatprep.mubr.bf16.mxu0 0
    %1484 = vmatmul.mubr.bf16.gmra.mxu0 %v930
    %v1485 = vpop.f32.mrf.mxu0
    %v1486 = vadd.f32 %v1325, %v1485
    %v1487 = vpop.f32.mrf.mxu0
    %v1488 = vadd.f32 %v1327, %v1487
    %v1489 = vpop.f32.mrf.mxu0
    %v1490 = vadd.f32 %v1329, %v1489
    %v1491 = vpop.f32.mrf.mxu0
    %v1492 = vadd.f32 %v1331, %v1491
    %1493 = vmatprep.mubr.bf16.mxu0 0
    %1494 = vmatmul.mubr.bf16.gmra.mxu0 %v933
    %v1495 = vpop.f32.mrf.mxu0
    %v1496 = vadd.f32 %v1335, %v1495
    %v1497 = vpop.f32.mrf.mxu0
    %v1498 = vadd.f32 %v1337, %v1497
    %v1499 = vpop.f32.mrf.mxu0
    %v1500 = vadd.f32 %v1339, %v1499
    %v1501 = vpop.f32.mrf.mxu0
    %v1502 = vadd.f32 %v1341, %v1501
    %1503 = vmatprep.mubr.bf16.mxu0 0
    %1504 = vmatmul.mubr.bf16.gmra.mxu0 %v936
    %v1505 = vpop.f32.mrf.mxu0
    %v1506 = vadd.f32 %v1345, %v1505
    %v1507 = vpop.f32.mrf.mxu0
    %v1508 = vadd.f32 %v1347, %v1507
    %v1509 = vpop.f32.mrf.mxu0
    %v1510 = vadd.f32 %v1349, %v1509
    %v1511 = vpop.f32.mrf.mxu0
    %v1512 = vadd.f32 %v1351, %v1511
    %1513 = vmatprep.mubr.bf16.mxu0 0
    %1514 = vmatmul.mubr.bf16.gmra.mxu0 %v939
    %v1515 = vpop.f32.mrf.mxu0
    %v1516 = vadd.f32 %v1355, %v1515
    %v1517 = vpop.f32.mrf.mxu0
    %v1518 = vadd.f32 %v1357, %v1517
    %v1519 = vpop.f32.mrf.mxu0
    %v1520 = vadd.f32 %v1359, %v1519
    %v1521 = vpop.f32.mrf.mxu0
    %v1522 = vadd.f32 %v1361, %v1521
    %1523 = vmatprep.mubr.bf16.mxu0 0
    %1524 = vmatmul.mubr.bf16.gmra.mxu0 %v942
    %v1525 = vpop.f32.mrf.mxu0
    %v1526 = vadd.f32 %v1365, %v1525
    %v1527 = vpop.f32.mrf.mxu0
    %v1528 = vadd.f32 %v1367, %v1527
    %v1529 = vpop.f32.mrf.mxu0
    %v1530 = vadd.f32 %v1369, %v1529
    %v1531 = vpop.f32.mrf.mxu0
    %v1532 = vadd.f32 %v1371, %v1531
    %1533 = vmatprep.mubr.bf16.mxu0 0
    %1534 = vmatmul.mubr.bf16.gmra.mxu0 %v945
    %v1535 = vpop.f32.mrf.mxu0
    %v1536 = vadd.f32 %v1375, %v1535
    %v1537 = vpop.f32.mrf.mxu0
    %v1538 = vadd.f32 %v1377, %v1537
    %v1539 = vpop.f32.mrf.mxu0
    %v1540 = vadd.f32 %v1379, %v1539
    %v1541 = vpop.f32.mrf.mxu0
    %v1542 = vadd.f32 %v1381, %v1541
    %1543 = vmatprep.mubr.bf16.mxu0 0
    %1544 = vmatmul.mubr.bf16.gmra.mxu0 %v948
    %v1545 = vpop.f32.mrf.mxu0
    %v1546 = vadd.f32 %v1385, %v1545
    %v1547 = vpop.f32.mrf.mxu0
    %v1548 = vadd.f32 %v1387, %v1547
    %v1549 = vpop.f32.mrf.mxu0
    %v1550 = vadd.f32 %v1389, %v1549
    %v1551 = vpop.f32.mrf.mxu0
    %v1552 = vadd.f32 %v1391, %v1551
    %1553 = vmatprep.mubr.bf16.mxu0 0
    %1554 = vmatmul.mubr.bf16.gmra.mxu0 %v951
    %v1555 = vpop.f32.mrf.mxu0
    %v1556 = vadd.f32 %v1395, %v1555
    %v1557 = vpop.f32.mrf.mxu0
    %v1558 = vadd.f32 %v1397, %v1557
    %v1559 = vpop.f32.mrf.mxu0
    %v1560 = vadd.f32 %v1399, %v1559
    %v1561 = vpop.f32.mrf.mxu0
    %v1562 = vadd.f32 %v1401, %v1561
    %1563 = vmatprep.mubr.bf16.mxu0 0
    %1564 = vmatmul.mubr.bf16.gmra.mxu0 %v954
    %v1565 = vpop.f32.mrf.mxu0
    %v1566 = vadd.f32 %v1405, %v1565
    %v1567 = vpop.f32.mrf.mxu0
    %v1568 = vadd.f32 %v1407, %v1567
    %v1569 = vpop.f32.mrf.mxu0
    %v1570 = vadd.f32 %v1409, %v1569
    %v1571 = vpop.f32.mrf.mxu0
    %v1572 = vadd.f32 %v1411, %v1571
    %1573 = vmatprep.mubr.bf16.mxu0 0
    %1574 = vmatmul.mubr.bf16.gmra.mxu0 %v957
    %v1575 = vpop.f32.mrf.mxu0
    %v1576 = vadd.f32 %v1415, %v1575
    %v1577 = vpop.f32.mrf.mxu0
    %v1578 = vadd.f32 %v1417, %v1577
    %v1579 = vpop.f32.mrf.mxu0
    %v1580 = vadd.f32 %v1419, %v1579
    %v1581 = vpop.f32.mrf.mxu0
    %v1582 = vadd.f32 %v1421, %v1581
    %1583 = vmatprep.mubr.bf16.mxu0 0
    %1584 = vmatmul.mubr.bf16.gmra.mxu0 %v960
    %v1585 = vpop.f32.mrf.mxu0
    %v1586 = vadd.f32 %v1425, %v1585
    %v1587 = vpop.f32.mrf.mxu0
    %v1588 = vadd.f32 %v1427, %v1587
    %v1589 = vpop.f32.mrf.mxu0
    %v1590 = vadd.f32 %v1429, %v1589
    %v1591 = vpop.f32.mrf.mxu0
    %v1592 = vadd.f32 %v1431, %v1591
    %1593 = vmatprep.mubr.bf16.mxu0 0
    %1594 = vmatmul.mubr.bf16.gmra.mxu0 %v963
    %v1595 = vpop.f32.mrf.mxu0
    %v1596 = vadd.f32 %v1435, %v1595
    %v1597 = vpop.f32.mrf.mxu0
    %v1598 = vadd.f32 %v1437, %v1597
    %v1599 = vpop.f32.mrf.mxu0
    %v1600 = vadd.f32 %v1439, %v1599
    %v1601 = vpop.f32.mrf.mxu0
    %v1602 = vadd.f32 %v1441, %v1601
    %1603 = vmatprep.mubr.bf16.mxu0 0
    %1604 = vmatmul.mubr.bf16.gmra.mxu0 %v966
    %v1605 = vpop.f32.mrf.mxu0
    %v1606 = vadd.f32 %v1445, %v1605
    %v1607 = vpop.f32.mrf.mxu0
    %v1608 = vadd.f32 %v1447, %v1607
    %v1609 = vpop.f32.mrf.mxu0
    %v1610 = vpop.f32.mrf.mxu0
    %1611 = vdwg.mxu0
    %v1612 = vmax.f32 %v1486, 0.0
    %v1613 = vmax.f32 %v1488, 0.0
    %v1614 = vmax.f32 %v1490, 0.0
    %v1615 = vmax.f32 %v1492, 0.0
    %v1616 = vmax.f32 %v1496, 0.0
    %v1617 = vmax.f32 %v1498, 0.0
    %v1618 = vmax.f32 %v1500, 0.0
    %v1619 = vmax.f32 %v1502, 0.0
    %v1620 = vmax.f32 %v1506, 0.0
    %v1621 = vmax.f32 %v1508, 0.0
    %v1622 = vmax.f32 %v1510, 0.0
    %v1623 = vmax.f32 %v1512, 0.0
    %v1624 = vmax.f32 %v1516, 0.0
    %v1625 = vmax.f32 %v1518, 0.0
    %v1626 = vmax.f32 %v1520, 0.0
    %v1627 = vmax.f32 %v1522, 0.0
    %v1628 = vmax.f32 %v1526, 0.0
    %v1629 = vmax.f32 %v1528, 0.0
    %v1630 = vmax.f32 %v1530, 0.0
    %v1631 = vmax.f32 %v1532, 0.0
    %v1632 = vmax.f32 %v1536, 0.0
    %v1633 = vmax.f32 %v1538, 0.0
    %v1634 = vmax.f32 %v1540, 0.0
    %v1635 = vmax.f32 %v1542, 0.0
    %v1636 = vmax.f32 %v1546, 0.0
    %v1637 = vmax.f32 %v1548, 0.0
    %v1638 = vmax.f32 %v1550, 0.0
    %v1639 = vmax.f32 %v1552, 0.0
    %v1640 = vmax.f32 %v1556, 0.0
    %v1641 = vmax.f32 %v1558, 0.0
    %v1642 = vmax.f32 %v1560, 0.0
    %v1643 = vmax.f32 %v1562, 0.0
    %v1644 = vmax.f32 %v1566, 0.0
    %v1645 = vmax.f32 %v1568, 0.0
    %v1646 = vmax.f32 %v1570, 0.0
    %v1647 = vmax.f32 %v1572, 0.0
    %v1648 = vmax.f32 %v1576, 0.0
    %v1649 = vmax.f32 %v1578, 0.0
    %v1650 = vmax.f32 %v1580, 0.0
    %v1651 = vmax.f32 %v1582, 0.0
    %v1652 = vmax.f32 %v1586, 0.0
    %v1653 = vmax.f32 %v1588, 0.0
    %v1654 = vmax.f32 %v1590, 0.0
    %v1655 = vmax.f32 %v1592, 0.0
    %v1656 = vmax.f32 %v1596, 0.0
    %v1657 = vmax.f32 %v1598, 0.0
    %v1658 = vmax.f32 %v1600, 0.0
    %v1659 = vmax.f32 %v1602, 0.0
    %v1660 = vmax.f32 %v1606, 0.0
    %v1661 = vmax.f32 %v1608, 0.0
    %v1662 = vld [vmem:[#allocation6] sm:$0xff]
    %v1663 = vld [vmem:[#allocation6 + $0x8] sm:$0xff]
    %v1664 = vld [vmem:[#allocation6 + $0x10] sm:$0xff]
    %v1665 = vld [vmem:[#allocation6 + $0x18] sm:$0xff]
    %v1666 = vld [vmem:[#allocation6 + $0x20] sm:$0xff]
    %v1667 = vld [vmem:[#allocation6 + $0x28] sm:$0xff]
    %v1668 = vld [vmem:[#allocation6 + $0x30] sm:$0xff]
    %v1669 = vld [vmem:[#allocation6 + $0x38] sm:$0xff]
    %v1670 = vld [vmem:[#allocation6 + $0x40] sm:$0xff]
    %v1671 = vld [vmem:[#allocation6 + $0x48] sm:$0xff]
    %v1672 = vld [vmem:[#allocation6 + $0x50] sm:$0xff]
    %v1673 = vld [vmem:[#allocation6 + $0x58] sm:$0xff]
    %v1674 = vld [vmem:[#allocation6 + $0x60] sm:$0xff]
    %v1675 = vld [vmem:[#allocation6 + $0x68] sm:$0xff]
    %v1676 = vld [vmem:[#allocation6 + $0x70] sm:$0xff]
    %v1677 = vld [vmem:[#allocation6 + $0x78] sm:$0xff]
    %v1678 = vld [vmem:[#allocation6 + $0x80] sm:$0xff]
    %v1679 = vld [vmem:[#allocation6 + $0x88] sm:$0xff]
    %v1680 = vld [vmem:[#allocation6 + $0x90] sm:$0xff]
    %v1681 = vld [vmem:[#allocation6 + $0x98] sm:$0xff]
    %v1682 = vld [vmem:[#allocation6 + $0xa0] sm:$0xff]
    %v1683 = vld [vmem:[#allocation6 + $0xa8] sm:$0xff]
    %v1684 = vld [vmem:[#allocation6 + $0xb0] sm:$0xff]
    %v1685 = vld [vmem:[#allocation6 + $0xb8] sm:$0xff]
    %v1686 = vld [vmem:[#allocation6 + $0xc0] sm:$0xff]
    %v1687 = vld [vmem:[#allocation6 + $0xc8] sm:$0xff]
    %v1688 = vld [vmem:[#allocation6 + $0xd0] sm:$0xff]
    %v1689 = vld [vmem:[#allocation6 + $0xd8] sm:$0xff]
    %v1690 = vld [vmem:[#allocation6 + $0xe0] sm:$0xff]
    %v1691 = vld [vmem:[#allocation6 + $0xe8] sm:$0xff]
    %v1692 = vld [vmem:[#allocation6 + $0xf0] sm:$0xff]
    %v1693 = vld [vmem:[#allocation6 + $0xf8] sm:$0xff]
    %v1694 = vld [vmem:[%s4] sm:$0x1]
    %v1696 = vlaneseq
    %v1697 = vshrl.u32 %v1696, 7
    %v1698 = vsub.s32 0, %v1697
    %v1699 = vrot.slane %v1694, %v1698
    %1701 = vmatprep.subr.mxu0 0.0
    %1702 = vmatpush1.msra.mxu0 %v1677
    %1703 = vmatprep.subr.mxu0 0.0
    %1704 = vmatpush1.msra.mxu0 %v1676
    %1705 = vmatprep.subr.mxu0 0.0
    %1706 = vmatpush1.msra.mxu0 %v1675
    %1707 = vmatprep.subr.mxu0 0.0
    %1708 = vmatpush1.msra.mxu0 %v1674
    %1709 = vmatprep.subr.mxu0 0.0
    %1710 = vmatpush1.msra.mxu0 %v1673
    %1711 = vmatprep.subr.mxu0 0.0
    %1712 = vmatpush1.msra.mxu0 %v1672
    %1713 = vmatprep.subr.mxu0 0.0
    %1714 = vmatpush1.msra.mxu0 %v1671
    %1715 = vmatprep.subr.mxu0 0.0
    %1716 = vmatpush1.msra.mxu0 %v1670
    %1717 = vmatprep.subr.mxu0 0.0
    %1718 = vmatpush1.msra.mxu0 %v1669
    %1719 = vmatprep.subr.mxu0 0.0
    %1720 = vmatpush1.msra.mxu0 %v1668
    %1721 = vmatprep.subr.mxu0 0.0
    %1722 = vmatpush1.msra.mxu0 %v1667
    %1723 = vmatprep.subr.mxu0 0.0
    %1724 = vmatpush1.msra.mxu0 %v1666
    %1725 = vmatprep.subr.mxu0 0.0
    %1726 = vmatpush1.msra.mxu0 %v1665
    %1727 = vmatprep.subr.mxu0 0.0
    %1728 = vmatpush1.msra.mxu0 %v1664
    %1729 = vmatprep.subr.mxu0 0.0
    %1730 = vmatpush1.msra.mxu0 %v1663
    %1731 = vmatprep.subr.mxu0 0.0
    %1732 = vmatpush1.msra.mxu0 %v1662
    %1733 = vmatprep.subr.mxu0 0.0
    %1734 = vmatpush2.msra.mxu0 %v1693
    %1735 = vmatprep.subr.mxu0 0.0
    %1736 = vmatpush2.msra.mxu0 %v1692
    %1737 = vmatprep.subr.mxu0 0.0
    %1738 = vmatpush2.msra.mxu0 %v1691
    %1739 = vmatprep.subr.mxu0 0.0
    %1740 = vmatpush2.msra.mxu0 %v1690
    %1741 = vmatprep.subr.mxu0 0.0
    %1742 = vmatpush2.msra.mxu0 %v1689
    %1743 = vmatprep.subr.mxu0 0.0
    %1744 = vmatpush2.msra.mxu0 %v1688
    %1745 = vmatprep.subr.mxu0 0.0
    %1746 = vmatpush2.msra.mxu0 %v1687
    %1747 = vmatprep.subr.mxu0 0.0
    %1748 = vmatpush2.msra.mxu0 %v1686
    %1749 = vmatprep.subr.mxu0 0.0
    %1750 = vmatpush2.msra.mxu0 %v1685
    %1751 = vmatprep.subr.mxu0 0.0
    %1752 = vmatpush2.msra.mxu0 %v1684
    %1753 = vmatprep.subr.mxu0 0.0
    %1754 = vmatpush2.msra.mxu0 %v1683
    %1755 = vmatprep.subr.mxu0 0.0
    %1756 = vmatpush2.msra.mxu0 %v1682
    %1757 = vmatprep.subr.mxu0 0.0
    %1758 = vmatpush2.msra.mxu0 %v1681
    %1759 = vmatprep.subr.mxu0 0.0
    %1760 = vmatpush2.msra.mxu0 %v1680
    %1761 = vmatprep.subr.mxu0 0.0
    %1762 = vmatpush2.msra.mxu0 %v1679
    %1763 = vmatprep.subr.mxu0 0.0
    %1764 = vmatpush2.msra.mxu0 %v1678
    %1765 = vmatprep.mubr.f32.mxu0 %v1613
    %1766 = vmatmul.mubr.f32.gmra.mxu0 %v1612
    %v1767 = vpop.f32.mrf.mxu0
    %v1768 = vadd.f32 %v1699, %v1767
    %v1769 = vpop.f32.mrf.mxu0
    %1770 = vmatprep.mubr.f32.mxu0 %v1615
    %1771 = vmatmul.mubr.f32.gmra.mxu0 %v1614
    %v1772 = vpop.f32.mrf.mxu0
    %v1773 = vadd.f32 %v1699, %v1772
    %v1774 = vpop.f32.mrf.mxu0
    %1775 = vmatprep.mubr.f32.mxu0 %v1617
    %1776 = vmatmul.mubr.f32.gmra.mxu0 %v1616
    %v1777 = vpop.f32.mrf.mxu0
    %v1778 = vadd.f32 %v1699, %v1777
    %v1779 = vpop.f32.mrf.mxu0
    %1780 = vmatprep.mubr.f32.mxu0 %v1619
    %1781 = vmatmul.mubr.f32.gmra.mxu0 %v1618
    %v1782 = vpop.f32.mrf.mxu0
    %v1783 = vadd.f32 %v1699, %v1782
    %v1784 = vpop.f32.mrf.mxu0
    %1785 = vmatprep.mubr.f32.mxu0 %v1621
    %1786 = vmatmul.mubr.f32.gmra.mxu0 %v1620
    %v1787 = vpop.f32.mrf.mxu0
    %v1788 = vadd.f32 %v1699, %v1787
    %v1789 = vpop.f32.mrf.mxu0
    %1790 = vmatprep.mubr.f32.mxu0 %v1623
    %1791 = vmatmul.mubr.f32.gmra.mxu0 %v1622
    %v1792 = vpop.f32.mrf.mxu0
    %v1793 = vadd.f32 %v1699, %v1792
    %v1794 = vpop.f32.mrf.mxu0
    %1795 = vmatprep.mubr.f32.mxu0 %v1625
    %1796 = vmatmul.mubr.f32.gmra.mxu0 %v1624
    %v1797 = vpop.f32.mrf.mxu0
    %v1798 = vadd.f32 %v1699, %v1797
    %v1799 = vpop.f32.mrf.mxu0
    %1800 = vmatprep.mubr.f32.mxu0 %v1627
    %1801 = vmatmul.mubr.f32.gmra.mxu0 %v1626
    %v1802 = vpop.f32.mrf.mxu0
    %v1803 = vadd.f32 %v1699, %v1802
    %v1804 = vpop.f32.mrf.mxu0
    %1805 = vmatprep.mubr.f32.mxu0 %v1629
    %1806 = vmatmul.mubr.f32.gmra.mxu0 %v1628
    %v1807 = vpop.f32.mrf.mxu0
    %v1808 = vadd.f32 %v1699, %v1807
    %v1809 = vpop.f32.mrf.mxu0
    %1810 = vmatprep.mubr.f32.mxu0 %v1631
    %1811 = vmatmul.mubr.f32.gmra.mxu0 %v1630
    %v1812 = vpop.f32.mrf.mxu0
    %v1813 = vadd.f32 %v1699, %v1812
    %v1814 = vpop.f32.mrf.mxu0
    %1815 = vmatprep.mubr.f32.mxu0 %v1633
    %1816 = vmatmul.mubr.f32.gmra.mxu0 %v1632
    %v1817 = vpop.f32.mrf.mxu0
    %v1818 = vadd.f32 %v1699, %v1817
    %v1819 = vpop.f32.mrf.mxu0
    %1820 = vmatprep.mubr.f32.mxu0 %v1635
    %1821 = vmatmul.mubr.f32.gmra.mxu0 %v1634
    %v1822 = vpop.f32.mrf.mxu0
    %v1823 = vadd.f32 %v1699, %v1822
    %v1824 = vpop.f32.mrf.mxu0
    %1825 = vmatprep.mubr.f32.mxu0 %v1637
    %1826 = vmatmul.mubr.f32.gmra.mxu0 %v1636
    %v1827 = vpop.f32.mrf.mxu0
    %v1828 = vadd.f32 %v1699, %v1827
    %v1829 = vpop.f32.mrf.mxu0
    %1830 = vmatprep.mubr.f32.mxu0 %v1639
    %1831 = vmatmul.mubr.f32.gmra.mxu0 %v1638
    %v1832 = vpop.f32.mrf.mxu0
    %v1833 = vadd.f32 %v1699, %v1832
    %v1834 = vpop.f32.mrf.mxu0
    %1835 = vmatprep.mubr.f32.mxu0 %v1641
    %1836 = vmatmul.mubr.f32.gmra.mxu0 %v1640
    %v1837 = vpop.f32.mrf.mxu0
    %v1838 = vadd.f32 %v1699, %v1837
    %v1839 = vpop.f32.mrf.mxu0
    %1840 = vmatprep.mubr.f32.mxu0 %v1643
    %1841 = vmatmul.mubr.f32.gmra.mxu0 %v1642
    %v1842 = vpop.f32.mrf.mxu0
    %v1843 = vadd.f32 %v1699, %v1842
    %v1844 = vpop.f32.mrf.mxu0
    %1845 = vmatprep.mubr.f32.mxu0 %v1645
    %1846 = vmatmul.mubr.f32.gmra.mxu0 %v1644
    %v1847 = vpop.f32.mrf.mxu0
    %v1848 = vadd.f32 %v1699, %v1847
    %v1849 = vpop.f32.mrf.mxu0
    %1850 = vmatprep.mubr.f32.mxu0 %v1647
    %1851 = vmatmul.mubr.f32.gmra.mxu0 %v1646
    %v1852 = vpop.f32.mrf.mxu0
    %v1853 = vadd.f32 %v1699, %v1852
    %v1854 = vpop.f32.mrf.mxu0
    %1855 = vmatprep.mubr.f32.mxu0 %v1649
    %1856 = vmatmul.mubr.f32.gmra.mxu0 %v1648
    %v1857 = vpop.f32.mrf.mxu0
    %v1858 = vadd.f32 %v1699, %v1857
    %v1859 = vpop.f32.mrf.mxu0
    %1860 = vmatprep.mubr.f32.mxu0 %v1651
    %1861 = vmatmul.mubr.f32.gmra.mxu0 %v1650
    %v1862 = vpop.f32.mrf.mxu0
    %v1863 = vadd.f32 %v1699, %v1862
    %v1864 = vpop.f32.mrf.mxu0
    %1865 = vmatprep.mubr.f32.mxu0 %v1653
    %1866 = vmatmul.mubr.f32.gmra.mxu0 %v1652
    %v1867 = vpop.f32.mrf.mxu0
    %v1868 = vadd.f32 %v1699, %v1867
    %v1869 = vpop.f32.mrf.mxu0
    %1870 = vmatprep.mubr.f32.mxu0 %v1655
    %1871 = vmatmul.mubr.f32.gmra.mxu0 %v1654
    %v1872 = vpop.f32.mrf.mxu0
    %v1873 = vadd.f32 %v1699, %v1872
    %v1874 = vpop.f32.mrf.mxu0
    %1875 = vmatprep.mubr.f32.mxu0 %v1657
    %1876 = vmatmul.mubr.f32.gmra.mxu0 %v1656
    %v1877 = vpop.f32.mrf.mxu0
    %v1878 = vadd.f32 %v1699, %v1877
    %v1879 = vpop.f32.mrf.mxu0
    %1880 = vmatprep.mubr.f32.mxu0 %v1659
    %1881 = vmatmul.mubr.f32.gmra.mxu0 %v1658
    %v1882 = vpop.f32.mrf.mxu0
    %v1883 = vadd.f32 %v1699, %v1882
    %v1884 = vpop.f32.mrf.mxu0
    %1885 = vmatprep.mubr.f32.mxu0 %v1661
    %1886 = vmatmul.mubr.f32.gmra.mxu0 %v1660
    %v1887 = vpop.f32.mrf.mxu0
    %v1888 = vadd.f32 %v1699, %v1887
    %v1889 = vpop.f32.mrf.mxu0
    %1890 = vdwg.mxu0
    %1891 = vst [vmem:[%s5] sm:$0xff] %v1768
    %1892 = vst [vmem:[%s5 + $0x8] sm:$0xff] %v1773
    %1893 = vst [vmem:[%s5 + $0x10] sm:$0xff] %v1778
    %1894 = vst [vmem:[%s5 + $0x18] sm:$0xff] %v1783
    %1895 = vst [vmem:[%s5 + $0x20] sm:$0xff] %v1788
    %1896 = vst [vmem:[%s5 + $0x28] sm:$0xff] %v1793
    %1897 = vst [vmem:[%s5 + $0x30] sm:$0xff] %v1798
    %1898 = vst [vmem:[%s5 + $0x38] sm:$0xff] %v1803
    %1899 = vst [vmem:[%s5 + $0x40] sm:$0xff] %v1808
    %1900 = vst [vmem:[%s5 + $0x48] sm:$0xff] %v1813
    %1901 = vst [vmem:[%s5 + $0x50] sm:$0xff] %v1818
    %1902 = vst [vmem:[%s5 + $0x58] sm:$0xff] %v1823
    %1903 = vst [vmem:[%s5 + $0x60] sm:$0xff] %v1828
    %1904 = vst [vmem:[%s5 + $0x68] sm:$0xff] %v1833
    %1905 = vst [vmem:[%s5 + $0x70] sm:$0xff] %v1838
    %1906 = vst [vmem:[%s5 + $0x78] sm:$0xff] %v1843
    %1907 = vst [vmem:[%s5 + $0x80] sm:$0xff] %v1848
    %1908 = vst [vmem:[%s5 + $0x88] sm:$0xff] %v1853
    %1909 = vst [vmem:[%s5 + $0x90] sm:$0xff] %v1858
    %1910 = vst [vmem:[%s5 + $0x98] sm:$0xff] %v1863
    %1911 = vst [vmem:[%s5 + $0xa0] sm:$0xff] %v1868
    %1912 = vst [vmem:[%s5 + $0xa8] sm:$0xff] %v1873
    %1913 = vst [vmem:[%s5 + $0xb0] sm:$0xff] %v1878
    %1914 = vst [vmem:[%s5 + $0xb8] sm:$0xff] %v1883
    %1915 = vst [vmem:[%s5 + $0xc0] sm:$0xff] %v1888
    // Predicated region
    $region34: #{my_sequential_forward.1} parent=1 // pred_check
      _
    $region35: #{my_sequential_forward.1} parent=1 // pred_check_branch
      %1917 = sbr.rel (0) target = $region37
    $region36: #{my_sequential_forward.1} parent=1 // pred_region
      _
    $region37: #{my_sequential_forward.1} parent=1 // pred_fallthru
      _
    // Predicated region
    $region38: #{my_sequential_forward.1} parent=1 // pred_check
      _
    $region39: #{my_sequential_forward.1} parent=1 // pred_check_branch
      %1919 = sbr.rel (0) target = $region41
    $region40: #{my_sequential_forward.1} parent=1 // pred_region
      _
    $region41: #{my_sequential_forward.1} parent=1 // pred_fallthru
      _
    %1920 = vsyncpa [#allocation3], 1
    %1921 = vsyncpa [#allocation5], 1

</llo_original>
